<compile_context>
chip_gen: v5e
topology: v5e:2x2
jax: 0.10.0
libtpu: 0.0.40
codegen_flags: <defaults>
</compile_context>

<pallas_src>
import functools
import math

import numpy as np

import jax
import jax.numpy as jnp
from jax.experimental import pallas as pl
from jax.experimental.pallas import tpu as pltpu


# -----------------------------------------------------------------------------
# Host-side (numpy) grid / mapping construction
# -----------------------------------------------------------------------------
def init_grid(n_spixels, w, h):
    """Regular superpixel grid initialisation (ESCNet-style init_grid)."""
    nw = int(math.sqrt(n_spixels * w / h))
    nh = int(math.sqrt(n_spixels * h / w))
    w_sp = (w + nw - 1) // nw
    h_sp = (h + nh - 1) // nh
    rw, rh = w_sp * nw - w, h_sp * nh - h
    if rw < 0 or rh < 0:
        raise ValueError("The number of superpixels is too small!")
    idx = np.arange(nw * nh, dtype=np.int32).reshape(nh, nw)
    idx = idx.repeat(h_sp, axis=0).repeat(w_sp, axis=1)
    idx = idx[rh // 2: rh // 2 + h, rw // 2: rw // 2 + w]
    return idx, nw * nh, nw, nh


def _neighbour_tables(imap, nw, nh, n_pad):
    """kabs[r, p]: absolute index of the r-th 3x3 neighbour of pixel p's
    initial superpixel; valid[r, p]: that neighbour exists in the grid."""
    h, w = imap.shape
    n = h * w
    flat = imap.reshape(-1).astype(np.int64)
    ky0, kx0 = flat // nw, flat % nw
    kabs = np.zeros((9, n_pad), np.int64)
    valid = np.zeros((9, n_pad), bool)
    for dy in (-1, 0, 1):
        for dx in (-1, 0, 1):
            r = (dy + 1) * 3 + (dx + 1)
            ky, kx = ky0 + dy, kx0 + dx
            ok = (ky >= 0) & (ky < nh) & (kx >= 0) & (kx < nw)
            kabs[r, :n] = np.where(ok, ky * nw + kx, 0)
            valid[r, :n] = ok
    return kabs, valid


def _build_layout(imap, nw, nh, k_total, n_pixels, tile_n):
    """Banded, tile-major one-hot map + per-tile K-band offsets."""
    T = max(128, min((tile_n // 128) * 128, ((n_pixels + 127) // 128) * 128))
    J = (n_pixels + T - 1) // T
    n_pad = J * T
    k_pad = ((k_total + 127) // 128) * 128

    kabs, valid = _neighbour_tables(imap, nw, nh, n_pad)

    # Per-pixel-tile candidate band (spans ~3 grid rows of superpixels).
    koffs = np.zeros((J,), np.int64)
    need = 1
    for j in range(J):
        v = valid[:, j * T:(j + 1) * T]
        if not v.any():
            continue
        ka = kabs[:, j * T:(j + 1) * T][v]
        lo, hi = int(ka.min()), int(ka.max())
        koffs[j] = (lo // 128) * 128
        need = max(need, hi - int(koffs[j]) + 1)
    k_band = min(k_pad, ((need + 127) // 128) * 128)
    koffs = np.minimum(koffs, k_pad - k_band)

    # Single banded scatter-layout one-hot map; the gather uses its transposed
    # contraction in-kernel.  mt[(j, r, i), k] = 1 iff superpixel koffs[j]+k is
    # the r-th 3x3 neighbour of pixel j*T+i's initial superpixel.
    mt = np.zeros((J, 9, T, k_band), np.float32)
    rows = np.arange(T)
    for j in range(J):
        for r in range(9):
            ok = valid[r, j * T:(j + 1) * T]
            cols = kabs[r, j * T:(j + 1) * T] - koffs[j]
            mt[j, r, rows[ok], cols[ok]] = 1.0

    return dict(
        T=T, J=J, Np=n_pad, K=k_total, K_pad=k_pad, K_band=k_band,
        nw=nw, nh=nh, imap=imap,
        mt=jnp.asarray(mt.reshape(J * 9 * T, k_band), dtype=jnp.bfloat16),
        bias=jnp.asarray(np.where(valid, 0.0, -1e30).astype(np.float32)),
        koffs_blk=jnp.asarray((koffs // 128).astype(np.int32)),
    )


def feat_converter(x, nw, nh, eta_pos=2.0, gamma_clr=0.1):
    """Deterministic stand-in for the injected `feat_cvrter` module: scaled xy
    coordinates concatenated with scaled input features."""
    # TODO(synk): the real feat_cvrter is injected into the PyTorch module.
    b, c, h, w = x.shape
    pos_scale = eta_pos * max(nw / w, nh / h)
    yy, xx = jnp.meshgrid(jnp.arange(h, dtype=jnp.float32),
                          jnp.arange(w, dtype=jnp.float32), indexing="ij")
    coords = jnp.stack([yy, xx], axis=0)
    coords = jnp.broadcast_to(coords[None], (b, 2, h, w))
    return jnp.concatenate([pos_scale * coords, gamma_clr * x], axis=1)


# -----------------------------------------------------------------------------
# Pallas kernel.  grid = (n_iters, n_pixel_tiles)
#   every sweep t: CalcAssoc (gather matmul) -> softmax -> map_p2sp (scatter
#   matmul); the last sweep writes Q and maps the RAW features to superpixels.
# -----------------------------------------------------------------------------
def _pixel2sp_kernel(koff_ref, pf_ref, psq_ref, praw_ref, spf0_ref,
                     mt_ref, bias_ref, q_ref, spf_out_ref, acc_sc, spf_sc,
                     *, n_iters, b, G, C, Craw, T, nb):
    t = pl.program_id(0)
    j = pl.program_id(1)
    last_t = n_iters - 1
    last_j = pl.num_programs(1) - 1
    kb0 = koff_ref[j]                     # K-band offset in 128-lane blocks
    is_last = t == last_t

    # Hard-init superpixel state (computed outside the grid) -> carry scratch.
    @pl.when(jnp.logical_and(t == 0, j == 0))
    def _():
        spf_sc[...] = spf0_ref[...]

    # Zero the num/den accumulator at the start of every pixel sweep.
    @pl.when(j == 0)
    def _():
        acc_sc[...] = jnp.zeros_like(acc_sc)

    mt = mt_ref[...]                                        # (9T, K_band) bf16

    # --- CalcAssoc gather: [spf ; |spf|^2] of all 9 candidates of each pixel,
    #     one transposed-contraction matmul against the banded one-hot map.
    parts = [spf_sc[kb0 + i] for i in range(nb)]            # each (bG, 128)
    spf_band = parts[0] if nb == 1 else jnp.concatenate(parts, axis=-1)
    g = jax.lax.dot_general(
        spf_band.astype(jnp.bfloat16), mt,
        dimension_numbers=(((1,), (1,)), ((), ())),
        preferred_element_type=jnp.float32)                 # (bG, 9T)

    pf = pf_ref[...]                                        # (bG, T)
    bias = bias_ref[...]                                    # (9, T)
    base = jnp.where(is_last, praw_ref[...], pf)            # (bG, T)

    q_tiles = []
    a_parts = []
    for ib in range(b):
        r0 = ib * G
        pf_b = pf[r0:r0 + C, :]                             # (C, T)
        nd_rows = []
        for r in range(9):
            g_r = g[r0:r0 + C + 1, r * T:(r + 1) * T]       # (C+1, T)
            cross = jnp.sum(pf_b * g_r[0:C, :], axis=0, keepdims=True)
            nd_rows.append(2.0 * cross - g_r[C:C + 1, :])
        # negative squared distance + validity mask, softmax over 9 neighbours
        nd = jnp.concatenate(nd_rows, axis=0) + bias - psq_ref[ib:ib + 1, :]
        m = jnp.max(nd, axis=0, keepdims=True)
        e = jnp.exp(nd - m)
        q9 = e / jnp.sum(e, axis=0, keepdims=True)          # (9, T)
        q_tiles.append(q9)

        base_b = base[r0:r0 + G, :]                         # (G, T)
        a_parts.append(jnp.concatenate(
            [base_b * q9[r:r + 1, :] for r in range(9)], axis=1))    # (G, 9T)

    # Only the final iteration's Q is returned by the reference forward.
    @pl.when(is_last)
    def _():
        for ib in range(b):
            q_ref[ib] = q_tiles[ib]

    # --- map_p2sp scatter: one long-contraction matmul; the denominator is
    #     folded in through the ones row of every batch block.
    a = a_parts[0] if b == 1 else jnp.concatenate(a_parts, axis=0)
    contrib = jnp.dot(a.astype(jnp.bfloat16), mt,
                      preferred_element_type=jnp.float32)   # (bG, K_band)
    for i in range(nb):
        acc_sc[kb0 + i] += contrib[:, i * 128:(i + 1) * 128]

    # --- finalize a sweep at its last pixel tile.
    @pl.when(jnp.logical_and(j == last_j, jnp.logical_not(is_last)))
    def _():
        for ib in range(b):
            r0 = ib * G
            # TODO(synk): verify epsilon handling against the reference op.
            den = jnp.maximum(acc_sc[:, r0 + C:r0 + C + 1, :], 1e-16)
            spf = acc_sc[:, r0:r0 + C, :] / den
            spf_sc[:, r0:r0 + C, :] = spf
            spf_sc[:, r0 + C:r0 + C + 1, :] = jnp.sum(
                spf * spf, axis=1, keepdims=True)

    @pl.when(jnp.logical_and(j == last_j, is_last))
    def _():
        for ib in range(b):
            r0 = ib * G
            den = jnp.maximum(acc_sc[:, r0 + C:r0 + C + 1, :], 1e-16)
            spf_out_ref[ib] = acc_sc[:, r0:r0 + Craw, :] / den


# -----------------------------------------------------------------------------
# Module wrapper
# -----------------------------------------------------------------------------
class Pixel2SP:
    """JAX/Pallas port of the PyTorch Pixel2SP forward pass (inference path)."""

    def __init__(self, n_iters=10, n_spixels=145 * 145 / 25, tile_n=512,
                 eta_pos=2.0, gamma_clr=0.1):
        if n_iters < 1:
            raise ValueError("n_iters must be >= 1 (the reference forward "
                             "uses Q from the last iteration).")
        if tile_n % 128 != 0:
            raise ValueError("tile_n must be a multiple of 128")
        self.n_iters = int(n_iters)
        self.n_spixels = n_spixels
        self.tile_n = int(tile_n)
        self.eta_pos = float(eta_pos)
        self.gamma_clr = float(gamma_clr)
        # nn.Parameter beta — deterministic init, unused in forward (parity).
        self.beta = jnp.array([1.0], dtype=jnp.float32)
        self._layout_cache = {}

    # -- host-side constants, cached per (h, w, n_spixels, tile) -------------
    def _layout_for(self, h, w, tile_n):
        key = (h, w, float(self.n_spixels), tile_n)
        lay = self._layout_cache.get(key)
        if lay is None:
            imap, k_total, nw, nh = init_grid(self.n_spixels, w, h)
            lay = _build_layout(imap, nw, nh, k_total, h * w, tile_n)
            self._layout_cache[key] = lay
        return lay

    @staticmethod
    def _vmem_budget():
        # v7x TensorCores only have 64 MiB of physical VMEM; v5e/v6e have 128.
        try:
            cap = int(pltpu.get_tpu_info().vmem_capacity_bytes)
        except Exception:
            cap = 64 << 20
        return min(cap * 3 // 4, 96 << 20)

    @staticmethod
    def _vmem_estimate(lay, b, G, c):
        T, K_pad, K_band = lay["T"], lay["K_pad"], lay["K_band"]
        Mpf, KB = b * G, K_pad // 128
        blocks = (
            Mpf * T * 4               # converted pixel rows [pf ; 1 ; pad]
            + b * T * 4               # |pf|^2 row per batch
            + Mpf * T * 4             # raw pixel rows
            + KB * Mpf * 128 * 4      # init superpixel state
            + 9 * T * K_band * 2      # banded one-hot map (bf16)
            + 9 * T * 4               # validity bias
            + b * 9 * T * 4           # Q (out)
            + b * KB * c * 128 * 4    # superpixel features (out)
        )
        scratch = 2 * KB * Mpf * 128 * 4
        return 2 * blocks + scratch   # double-buffered blocks + scratch

    def __call__(self, x):
        b, c, h, w = x.shape
        N = h * w
        C = 2 + c                           # xy + colour channels after conv
        G = 8 * ((C + 1 + 7) // 8)          # per-batch row group (padded to 8)
        budget = self._vmem_budget()

        tile = self.tile_n
        while True:
            lay = self._layout_for(h, w, tile)
            est = self._vmem_estimate(lay, b, G, c)
            if est <= budget or lay["T"] <= 128:
                break
            tile = lay["T"] // 2

        T, J, Np = lay["T"], lay["J"], lay["Np"]
        K, K_pad, K_band = lay["K"], lay["K_pad"], lay["K_band"]
        nw, nh, imap = lay["nw"], lay["nh"], lay["imap"]
        KB, nb, Mpf = K_pad // 128, K_band // 128, b * G

        # ---- pixel features (converted + raw), padded & row-stacked ---------
        xf = x.astype(jnp.float32)
        pf = feat_converter(xf, nw, nh, self.eta_pos, self.gamma_clr)
        pf_flat = jnp.pad(pf.reshape(b, C, N), ((0, 0), (0, 0), (0, Np - N)))
        x_flat = jnp.pad(xf.reshape(b, c, N), ((0, 0), (0, 0), (0, Np - N)))
        ones = jnp.ones((b, 1, Np), jnp.float32)
        pad_g = jnp.zeros((b, G - C - 1, Np), jnp.float32)

        pf_main = jnp.concatenate([pf_flat, ones, pad_g], axis=1).reshape(Mpf, Np)
        praw_main = jnp.concatenate(
            [x_flat, jnp.zeros((b, C - c, Np), jnp.float32), ones, pad_g],
            axis=1).reshape(Mpf, Np)
        psq = jnp.sum(pf_flat * pf_flat, axis=1)                        # (b, Np)

        # ---- hard init (InitSpixelFeats): per-superpixel mean, plain JAX ----
        ids = jnp.asarray(np.asarray(imap).reshape(-1), jnp.int32)
        sums = jax.ops.segment_sum(
            pf.reshape(b, C, N).transpose(2, 0, 1), ids, num_segments=K)
        cnt = jax.ops.segment_sum(jnp.ones((N,), jnp.float32), ids,
                                  num_segments=K)
        spf0 = (sums / jnp.maximum(cnt, 1.0)[:, None, None]).transpose(1, 2, 0)
        spf0_sq = jnp.sum(spf0 * spf0, axis=1, keepdims=True)
        spf0_rows = jnp.concatenate(
            [spf0, spf0_sq, jnp.zeros((b, G - C - 1, K), jnp.float32)], axis=1)
        spf0_main = jnp.pad(spf0_rows.reshape(Mpf, K), ((0, 0), (0, K_pad - K)))
        spf0_blk = spf0_main.reshape(Mpf, KB, 128).transpose(1, 0, 2)

        kernel = functools.partial(
            _pixel2sp_kernel, n_iters=self.n_iters, b=b, G=G, C=C,
            Craw=c, T=T, nb=nb)

        grid_spec = pltpu.PrefetchScalarGridSpec(
            num_scalar_prefetch=1,
            grid=(self.n_iters, J),
            in_specs=[
                pl.BlockSpec((Mpf, T), lambda t, j, ko: (0, j)),      # pf rows
                pl.BlockSpec((b, T), lambda t, j, ko: (0, j)),        # |pf|^2
                pl.BlockSpec((Mpf, T), lambda t, j, ko: (0, j)),      # raw rows
                pl.BlockSpec((KB, Mpf, 128), lambda t, j, ko: (0, 0, 0)),
                pl.BlockSpec((9 * T, K_band), lambda t, j, ko: (j, 0)),  # MT
                pl.BlockSpec((9, T), lambda t, j, ko: (0, j)),        # bias
            ],
            out_specs=(
                pl.BlockSpec((b, 9, T), lambda t, j, ko: (0, 0, j)),
                pl.BlockSpec((b, KB, c, 128), lambda t, j, ko: (0, 0, 0, 0)),
            ),
            scratch_shapes=[
                pltpu.VMEM((KB, Mpf, 128), jnp.float32),   # num/den accumulator
                pltpu.VMEM((KB, Mpf, 128), jnp.float32),   # [spf ; |spf|^2]
            ],
        )

        vmem_limit = int(min(budget, max(32 << 20, 2 * est)))
        vmem_limit = int(max(vmem_limit, est + (4 << 20)))

        q, spf_raw = pl.pallas_call(
            kernel,
            grid_spec=grid_spec,
            out_shape=(jax.ShapeDtypeStruct((b, 9, Np), jnp.float32),
                       jax.ShapeDtypeStruct((b, KB, c, 128), jnp.float32)),
            compiler_params=pltpu.CompilerParams(
                # Both axes carry state (spf across sweeps, acc across tiles).
                dimension_semantics=("arbitrary", "arbitrary"),
                vmem_limit_bytes=vmem_limit),
        )(lay["koffs_blk"], pf_main, psq, praw_main, spf0_blk,
          lay["mt"], lay["bias"])

        Q = q[:, :, :N].reshape(b, 9, h, w)
        spf = spf_raw.transpose(0, 2, 1, 3).reshape(b, c, K_pad)[:, :, :K]
        init_idx_map = jnp.broadcast_to(
            jnp.asarray(np.asarray(imap), jnp.int32)[None, None], (b, 1, h, w))
        layout = (init_idx_map, nw, nh)
        # TODO(synk): the PyTorch `ops` dict (map_sp2p, map_idx, smear) holds op
        # objects never invoked in forward; the grid layout is returned instead.
        return Q, layout, x, spf, x


if __name__ == "__main__":
    key = jax.random.PRNGKey(0)
    x = jax.random.normal(key, (2, 4, 16, 16), dtype=jnp.float32)
    # 4x4 superpixel grid on a 16x16 image; tile_n=128 exercises the
    # multi-tile (J=2) accumulation / K-band path.
    model = Pixel2SP(n_iters=10, n_spixels=16, tile_n=128)
    Q, layout, x_out, spf, pf_ = model(x)
    jax.block_until_ready((Q, spf))
    assert Q.shape == (2, 9, 16, 16) and spf.shape == (2, 4, 16)
    assert bool(jnp.all(jnp.isfinite(Q))) and bool(jnp.all(jnp.isfinite(spf)))
    # soft associations must sum to 1 over the 9 neighbours
    assert bool(jnp.allclose(jnp.sum(Q, axis=1), 1.0, atol=1e-3))
    print("KERNEL_OK")
</pallas_src>

<mosaic_0001>
module attributes {stable_mosaic.version = 11 : i64} {
  func.func @_pixel2sp_kernel(%arg0: i32, %arg1: i32, %arg2: memref<2xi32, #tpu.memory_space<smem>>, %arg3: memref<16x128xf32, #tpu.memory_space<vmem>>, %arg4: memref<2x128xf32, #tpu.memory_space<vmem>>, %arg5: memref<16x128xf32, #tpu.memory_space<vmem>>, %arg6: memref<1x16x128xf32, #tpu.memory_space<vmem>>, %arg7: memref<1152x128xbf16, #tpu.memory_space<vmem>>, %arg8: memref<9x128xf32, #tpu.memory_space<vmem>>, %arg9: memref<2x9x128xf32, #tpu.memory_space<vmem>>, %arg10: memref<2x1x4x128xf32, #tpu.memory_space<vmem>>, %arg11: memref<1x16x128xf32, #tpu.memory_space<vmem>>, %arg12: memref<1x16x128xf32, #tpu.memory_space<vmem>>) attributes {dimension_semantics = [#tpu.dimension_semantics<arbitrary>, #tpu.dimension_semantics<arbitrary>], iteration_bounds = array<i64: 10, 2>, scalar_prefetch = 1 : i64, scratch_operands = 2 : i64, tpu.core_type = #tpu.core_type<tc>, window_params = [{transform_indices = @transform_0, window_bounds = array<i64: 16, 128>}, {transform_indices = @transform_1, window_bounds = array<i64: 2, 128>}, {transform_indices = @transform_2, window_bounds = array<i64: 16, 128>}, {pipeline_mode = #tpu.pipeline_mode<synchronous>, transform_indices = @transform_3, window_bounds = array<i64: 1, 16, 128>}, {transform_indices = @transform_4, window_bounds = array<i64: 1152, 128>}, {transform_indices = @transform_5, window_bounds = array<i64: 9, 128>}, {transform_indices = @transform_6, window_bounds = array<i64: 2, 9, 128>}, {pipeline_mode = #tpu.pipeline_mode<synchronous>, transform_indices = @transform_7, window_bounds = array<i64: 2, 1, 4, 128>}]} {
    %0 = arith.index_cast %arg1 : i32 to index
    %1 = memref.load %arg2[%0] : memref<2xi32, #tpu.memory_space<smem>>
    %c9_i32 = arith.constant 9 : i32
    %2 = arith.cmpi eq, %arg0, %c9_i32 : i32
    %c0_i32 = arith.constant 0 : i32
    %3 = arith.cmpi eq, %arg0, %c0_i32 : i32
    %c0_i32_0 = arith.constant 0 : i32
    %4 = arith.cmpi eq, %arg1, %c0_i32_0 : i32
    %5 = arith.andi %3, %4 : i1
    %6 = arith.extui %5 : i1 to i32
    %c0_i32_1 = arith.constant 0 : i32
    %7 = arith.cmpi ne, %6, %c0_i32_1 : i32
    scf.if %7 {
      %c0_67 = arith.constant 0 : index
      %c0_68 = arith.constant 0 : index
      %c0_69 = arith.constant 0 : index
      %295 = vector.load %arg6[%c0_67, %c0_68, %c0_69] : memref<1x16x128xf32, #tpu.memory_space<vmem>>, vector<1x16x128xf32>
      %c0_70 = arith.constant 0 : index
      %c0_71 = arith.constant 0 : index
      %c0_72 = arith.constant 0 : index
      %296 = vector.load %arg12[%c0_70, %c0_71, %c0_72] : memref<1x16x128xf32, #tpu.memory_space<vmem>>, vector<1x16x128xf32>
      tpu.vector_store %arg12[%c0_70, %c0_71, %c0_72], %295 {strides = array<i32>} : memref<1x16x128xf32, #tpu.memory_space<vmem>>, vector<1x16x128xf32>,
    } else {
    }
    %c0_i32_2 = arith.constant 0 : i32
    %8 = arith.cmpi eq, %arg1, %c0_i32_2 : i32
    %9 = arith.extui %8 : i1 to i32
    %c0_i32_3 = arith.constant 0 : i32
    %10 = arith.cmpi ne, %9, %c0_i32_3 : i32
    scf.if %10 {
      %cst_67 = arith.constant 0.000000e+00 : f32
      %295 = vector.broadcast %cst_67 : f32 to vector<1x16x128xf32>
      %c0_68 = arith.constant 0 : index
      %c0_69 = arith.constant 0 : index
      %c0_70 = arith.constant 0 : index
      %296 = vector.load %arg11[%c0_68, %c0_69, %c0_70] : memref<1x16x128xf32, #tpu.memory_space<vmem>>, vector<1x16x128xf32>
      tpu.vector_store %arg11[%c0_68, %c0_69, %c0_70], %295 {strides = array<i32>} : memref<1x16x128xf32, #tpu.memory_space<vmem>>, vector<1x16x128xf32>,
    } else {
    }
    %c0 = arith.constant 0 : index
    %c0_4 = arith.constant 0 : index
    %11 = vector.load %arg7[%c0, %c0_4] : memref<1152x128xbf16, #tpu.memory_space<vmem>>, vector<1152x128xbf16>
    %c0_i32_5 = arith.constant 0 : i32
    %12 = arith.addi %1, %c0_i32_5 : i32
    %13 = arith.index_cast %12 : i32 to index
    %c0_6 = arith.constant 0 : index
    %c0_7 = arith.constant 0 : index
    %14 = vector.load %arg12[%13, %c0_6, %c0_7] : memref<1x16x128xf32, #tpu.memory_space<vmem>>, vector<1x16x128xf32>
    %15 = vector.shape_cast %14 : vector<1x16x128xf32> to vector<16x128xf32>
    %16 = arith.truncf %15 : vector<16x128xf32> to vector<16x128xbf16>
    %cst = arith.constant dense<0.000000e+00> : vector<16x1152xf32>
    %17 = tpu.matmul %16, %11, %cst {dimension_numbers = #tpu.dot_dimension_numbers<[1], [1], [0], [0], [0, 0, 1, 0], [], []>} : vector<16x128xbf16>, vector<1152x128xbf16>, vector<16x1152xf32> -> vector<16x1152xf32>
    %c0_8 = arith.constant 0 : index
    %c0_9 = arith.constant 0 : index
    %18 = vector.load %arg3[%c0_8, %c0_9] : memref<16x128xf32, #tpu.memory_space<vmem>>, vector<16x128xf32>
    %c0_10 = arith.constant 0 : index
    %c0_11 = arith.constant 0 : index
    %19 = vector.load %arg8[%c0_10, %c0_11] : memref<9x128xf32, #tpu.memory_space<vmem>>, vector<9x128xf32>
    %c0_12 = arith.constant 0 : index
    %c0_13 = arith.constant 0 : index
    %20 = vector.load %arg5[%c0_12, %c0_13] : memref<16x128xf32, #tpu.memory_space<vmem>>, vector<16x128xf32>
    %21 = arith.select %2, %20, %18 : vector<16x128xf32>
    %22 = vector.extract_strided_slice %18 {offsets = [0, 0], sizes = [6, 128], strides = [1, 1]} : vector<16x128xf32> to vector<6x128xf32>
    %23 = vector.extract_strided_slice %17 {offsets = [0, 0], sizes = [7, 128], strides = [1, 1]} : vector<16x1152xf32> to vector<7x128xf32>
    %24 = vector.extract_strided_slice %23 {offsets = [0, 0], sizes = [6, 128], strides = [1, 1]} : vector<7x128xf32> to vector<6x128xf32>
    %25 = arith.mulf %22, %24 : vector<6x128xf32>
    %cst_14 = arith.constant dense<0.000000e+00> : vector<128xf32>
    %26 = vector.multi_reduction <add>, %25, %cst_14 [0] : vector<6x128xf32> to vector<128xf32>
    %27 = vector.shape_cast %26 : vector<128xf32> to vector<1x128xf32>
    %cst_15 = arith.constant 2.000000e+00 : f32
    %28 = vector.broadcast %cst_15 : f32 to vector<1x128xf32>
    %29 = arith.mulf %28, %27 : vector<1x128xf32>
    %30 = vector.extract_strided_slice %23 {offsets = [6, 0], sizes = [1, 128], strides = [1, 1]} : vector<7x128xf32> to vector<1x128xf32>
    %31 = arith.subf %29, %30 : vector<1x128xf32>
    %32 = vector.extract_strided_slice %17 {offsets = [0, 128], sizes = [7, 128], strides = [1, 1]} : vector<16x1152xf32> to vector<7x128xf32>
    %33 = vector.extract_strided_slice %32 {offsets = [0, 0], sizes = [6, 128], strides = [1, 1]} : vector<7x128xf32> to vector<6x128xf32>
    %34 = arith.mulf %22, %33 : vector<6x128xf32>
    %cst_16 = arith.constant dense<0.000000e+00> : vector<128xf32>
    %35 = vector.multi_reduction <add>, %34, %cst_16 [0] : vector<6x128xf32> to vector<128xf32>
    %36 = vector.shape_cast %35 : vector<128xf32> to vector<1x128xf32>
    %cst_17 = arith.constant 2.000000e+00 : f32
    %37 = vector.broadcast %cst_17 : f32 to vector<1x128xf32>
    %38 = arith.mulf %37, %36 : vector<1x128xf32>
    %39 = vector.extract_strided_slice %32 {offsets = [6, 0], sizes = [1, 128], strides = [1, 1]} : vector<7x128xf32> to vector<1x128xf32>
    %40 = arith.subf %38, %39 : vector<1x128xf32>
    %41 = vector.extract_strided_slice %17 {offsets = [0, 256], sizes = [7, 128], strides = [1, 1]} : vector<16x1152xf32> to vector<7x128xf32>
    %42 = vector.extract_strided_slice %41 {offsets = [0, 0], sizes = [6, 128], strides = [1, 1]} : vector<7x128xf32> to vector<6x128xf32>
    %43 = arith.mulf %22, %42 : vector<6x128xf32>
    %cst_18 = arith.constant dense<0.000000e+00> : vector<128xf32>
    %44 = vector.multi_reduction <add>, %43, %cst_18 [0] : vector<6x128xf32> to vector<128xf32>
    %45 = vector.shape_cast %44 : vector<128xf32> to vector<1x128xf32>
    %cst_19 = arith.constant 2.000000e+00 : f32
    %46 = vector.broadcast %cst_19 : f32 to vector<1x128xf32>
    %47 = arith.mulf %46, %45 : vector<1x128xf32>
    %48 = vector.extract_strided_slice %41 {offsets = [6, 0], sizes = [1, 128], strides = [1, 1]} : vector<7x128xf32> to vector<1x128xf32>
    %49 = arith.subf %47, %48 : vector<1x128xf32>
    %50 = vector.extract_strided_slice %17 {offsets = [0, 384], sizes = [7, 128], strides = [1, 1]} : vector<16x1152xf32> to vector<7x128xf32>
    %51 = vector.extract_strided_slice %50 {offsets = [0, 0], sizes = [6, 128], strides = [1, 1]} : vector<7x128xf32> to vector<6x128xf32>
    %52 = arith.mulf %22, %51 : vector<6x128xf32>
    %cst_20 = arith.constant dense<0.000000e+00> : vector<128xf32>
    %53 = vector.multi_reduction <add>, %52, %cst_20 [0] : vector<6x128xf32> to vector<128xf32>
    %54 = vector.shape_cast %53 : vector<128xf32> to vector<1x128xf32>
    %cst_21 = arith.constant 2.000000e+00 : f32
    %55 = vector.broadcast %cst_21 : f32 to vector<1x128xf32>
    %56 = arith.mulf %55, %54 : vector<1x128xf32>
    %57 = vector.extract_strided_slice %50 {offsets = [6, 0], sizes = [1, 128], strides = [1, 1]} : vector<7x128xf32> to vector<1x128xf32>
    %58 = arith.subf %56, %57 : vector<1x128xf32>
    %59 = vector.extract_strided_slice %17 {offsets = [0, 512], sizes = [7, 128], strides = [1, 1]} : vector<16x1152xf32> to vector<7x128xf32>
    %60 = vector.extract_strided_slice %59 {offsets = [0, 0], sizes = [6, 128], strides = [1, 1]} : vector<7x128xf32> to vector<6x128xf32>
    %61 = arith.mulf %22, %60 : vector<6x128xf32>
    %cst_22 = arith.constant dense<0.000000e+00> : vector<128xf32>
    %62 = vector.multi_reduction <add>, %61, %cst_22 [0] : vector<6x128xf32> to vector<128xf32>
    %63 = vector.shape_cast %62 : vector<128xf32> to vector<1x128xf32>
    %cst_23 = arith.constant 2.000000e+00 : f32
    %64 = vector.broadcast %cst_23 : f32 to vector<1x128xf32>
    %65 = arith.mulf %64, %63 : vector<1x128xf32>
    %66 = vector.extract_strided_slice %59 {offsets = [6, 0], sizes = [1, 128], strides = [1, 1]} : vector<7x128xf32> to vector<1x128xf32>
    %67 = arith.subf %65, %66 : vector<1x128xf32>
    %68 = vector.extract_strided_slice %17 {offsets = [0, 640], sizes = [7, 128], strides = [1, 1]} : vector<16x1152xf32> to vector<7x128xf32>
    %69 = vector.extract_strided_slice %68 {offsets = [0, 0], sizes = [6, 128], strides = [1, 1]} : vector<7x128xf32> to vector<6x128xf32>
    %70 = arith.mulf %22, %69 : vector<6x128xf32>
    %cst_24 = arith.constant dense<0.000000e+00> : vector<128xf32>
    %71 = vector.multi_reduction <add>, %70, %cst_24 [0] : vector<6x128xf32> to vector<128xf32>
    %72 = vector.shape_cast %71 : vector<128xf32> to vector<1x128xf32>
    %cst_25 = arith.constant 2.000000e+00 : f32
    %73 = vector.broadcast %cst_25 : f32 to vector<1x128xf32>
    %74 = arith.mulf %73, %72 : vector<1x128xf32>
    %75 = vector.extract_strided_slice %68 {offsets = [6, 0], sizes = [1, 128], strides = [1, 1]} : vector<7x128xf32> to vector<1x128xf32>
    %76 = arith.subf %74, %75 : vector<1x128xf32>
    %77 = vector.extract_strided_slice %17 {offsets = [0, 768], sizes = [7, 128], strides = [1, 1]} : vector<16x1152xf32> to vector<7x128xf32>
    %78 = vector.extract_strided_slice %77 {offsets = [0, 0], sizes = [6, 128], strides = [1, 1]} : vector<7x128xf32> to vector<6x128xf32>
    %79 = arith.mulf %22, %78 : vector<6x128xf32>
    %cst_26 = arith.constant dense<0.000000e+00> : vector<128xf32>
    %80 = vector.multi_reduction <add>, %79, %cst_26 [0] : vector<6x128xf32> to vector<128xf32>
    %81 = vector.shape_cast %80 : vector<128xf32> to vector<1x128xf32>
    %cst_27 = arith.constant 2.000000e+00 : f32
    %82 = vector.broadcast %cst_27 : f32 to vector<1x128xf32>
    %83 = arith.mulf %82, %81 : vector<1x128xf32>
    %84 = vector.extract_strided_slice %77 {offsets = [6, 0], sizes = [1, 128], strides = [1, 1]} : vector<7x128xf32> to vector<1x128xf32>
    %85 = arith.subf %83, %84 : vector<1x128xf32>
    %86 = vector.extract_strided_slice %17 {offsets = [0, 896], sizes = [7, 128], strides = [1, 1]} : vector<16x1152xf32> to vector<7x128xf32>
    %87 = vector.extract_strided_slice %86 {offsets = [0, 0], sizes = [6, 128], strides = [1, 1]} : vector<7x128xf32> to vector<6x128xf32>
    %88 = arith.mulf %22, %87 : vector<6x128xf32>
    %cst_28 = arith.constant dense<0.000000e+00> : vector<128xf32>
    %89 = vector.multi_reduction <add>, %88, %cst_28 [0] : vector<6x128xf32> to vector<128xf32>
    %90 = vector.shape_cast %89 : vector<128xf32> to vector<1x128xf32>
    %cst_29 = arith.constant 2.000000e+00 : f32
    %91 = vector.broadcast %cst_29 : f32 to vector<1x128xf32>
    %92 = arith.mulf %91, %90 : vector<1x128xf32>
    %93 = vector.extract_strided_slice %86 {offsets = [6, 0], sizes = [1, 128], strides = [1, 1]} : vector<7x128xf32> to vector<1x128xf32>
    %94 = arith.subf %92, %93 : vector<1x128xf32>
    %95 = vector.extract_strided_slice %17 {offsets = [0, 1024], sizes = [7, 128], strides = [1, 1]} : vector<16x1152xf32> to vector<7x128xf32>
    %96 = vector.extract_strided_slice %95 {offsets = [0, 0], sizes = [6, 128], strides = [1, 1]} : vector<7x128xf32> to vector<6x128xf32>
    %97 = arith.mulf %22, %96 : vector<6x128xf32>
    %cst_30 = arith.constant dense<0.000000e+00> : vector<128xf32>
    %98 = vector.multi_reduction <add>, %97, %cst_30 [0] : vector<6x128xf32> to vector<128xf32>
    %99 = vector.shape_cast %98 : vector<128xf32> to vector<1x128xf32>
    %cst_31 = arith.constant 2.000000e+00 : f32
    %100 = vector.broadcast %cst_31 : f32 to vector<1x128xf32>
    %101 = arith.mulf %100, %99 : vector<1x128xf32>
    %102 = vector.extract_strided_slice %95 {offsets = [6, 0], sizes = [1, 128], strides = [1, 1]} : vector<7x128xf32> to vector<1x128xf32>
    %103 = arith.subf %101, %102 : vector<1x128xf32>
    %104 = tpu.concatenate %31, %40, %49, %58, %67, %76, %85, %94, %103 in 0 : vector<1x128xf32>, vector<1x128xf32>, vector<1x128xf32>, vector<1x128xf32>, vector<1x128xf32>, vector<1x128xf32>, vector<1x128xf32>, vector<1x128xf32>, vector<1x128xf32> -> vector<9x128xf32>
    %105 = arith.addf %104, %19 : vector<9x128xf32>
    %c0_32 = arith.constant 0 : index
    %c0_33 = arith.constant 0 : index
    %106 = vector.load %arg4[%c0_32, %c0_33] : memref<2x128xf32, #tpu.memory_space<vmem>>, vector<1x128xf32>
    %107 = vector.broadcast %106 : vector<1x128xf32> to vector<9x128xf32>
    %108 = arith.subf %105, %107 : vector<9x128xf32>
    %cst_34 = arith.constant dense<0xFF800000> : vector<128xf32>
    %109 = vector.multi_reduction <maximumf>, %108, %cst_34 [0] : vector<9x128xf32> to vector<128xf32>
    %110 = vector.shape_cast %109 : vector<128xf32> to vector<1x128xf32>
    %111 = vector.broadcast %110 : vector<1x128xf32> to vector<9x128xf32>
    %112 = arith.subf %108, %111 : vector<9x128xf32>
    %113 = math.exp %112 : vector<9x128xf32>
    %cst_35 = arith.constant dense<0.000000e+00> : vector<128xf32>
    %114 = vector.multi_reduction <add>, %113, %cst_35 [0] : vector<9x128xf32> to vector<128xf32>
    %115 = vector.shape_cast %114 : vector<128xf32> to vector<1x128xf32>
    %116 = vector.broadcast %115 : vector<1x128xf32> to vector<9x128xf32>
    %117 = arith.divf %113, %116 : vector<9x128xf32>
    %118 = vector.extract_strided_slice %21 {offsets = [0, 0], sizes = [8, 128], strides = [1, 1]} : vector<16x128xf32> to vector<8x128xf32>
    %119 = vector.extract_strided_slice %117 {offsets = [0, 0], sizes = [1, 128], strides = [1, 1]} : vector<9x128xf32> to vector<1x128xf32>
    %120 = vector.broadcast %119 : vector<1x128xf32> to vector<8x128xf32>
    %121 = arith.mulf %118, %120 : vector<8x128xf32>
    %122 = vector.extract_strided_slice %117 {offsets = [1, 0], sizes = [1, 128], strides = [1, 1]} : vector<9x128xf32> to vector<1x128xf32>
    %123 = vector.broadcast %122 : vector<1x128xf32> to vector<8x128xf32>
    %124 = arith.mulf %118, %123 : vector<8x128xf32>
    %125 = vector.extract_strided_slice %117 {offsets = [2, 0], sizes = [1, 128], strides = [1, 1]} : vector<9x128xf32> to vector<1x128xf32>
    %126 = vector.broadcast %125 : vector<1x128xf32> to vector<8x128xf32>
    %127 = arith.mulf %118, %126 : vector<8x128xf32>
    %128 = vector.extract_strided_slice %117 {offsets = [3, 0], sizes = [1, 128], strides = [1, 1]} : vector<9x128xf32> to vector<1x128xf32>
    %129 = vector.broadcast %128 : vector<1x128xf32> to vector<8x128xf32>
    %130 = arith.mulf %118, %129 : vector<8x128xf32>
    %131 = vector.extract_strided_slice %117 {offsets = [4, 0], sizes = [1, 128], strides = [1, 1]} : vector<9x128xf32> to vector<1x128xf32>
    %132 = vector.broadcast %131 : vector<1x128xf32> to vector<8x128xf32>
    %133 = arith.mulf %118, %132 : vector<8x128xf32>
    %134 = vector.extract_strided_slice %117 {offsets = [5, 0], sizes = [1, 128], strides = [1, 1]} : vector<9x128xf32> to vector<1x128xf32>
    %135 = vector.broadcast %134 : vector<1x128xf32> to vector<8x128xf32>
    %136 = arith.mulf %118, %135 : vector<8x128xf32>
    %137 = vector.extract_strided_slice %117 {offsets = [6, 0], sizes = [1, 128], strides = [1, 1]} : vector<9x128xf32> to vector<1x128xf32>
    %138 = vector.broadcast %137 : vector<1x128xf32> to vector<8x128xf32>
    %139 = arith.mulf %118, %138 : vector<8x128xf32>
    %140 = vector.extract_strided_slice %117 {offsets = [7, 0], sizes = [1, 128], strides = [1, 1]} : vector<9x128xf32> to vector<1x128xf32>
    %141 = vector.broadcast %140 : vector<1x128xf32> to vector<8x128xf32>
    %142 = arith.mulf %118, %141 : vector<8x128xf32>
    %143 = vector.extract_strided_slice %117 {offsets = [8, 0], sizes = [1, 128], strides = [1, 1]} : vector<9x128xf32> to vector<1x128xf32>
    %144 = vector.broadcast %143 : vector<1x128xf32> to vector<8x128xf32>
    %145 = arith.mulf %118, %144 : vector<8x128xf32>
    %146 = tpu.concatenate %121, %124, %127, %130, %133, %136, %139, %142, %145 in 1 : vector<8x128xf32>, vector<8x128xf32>, vector<8x128xf32>, vector<8x128xf32>, vector<8x128xf32>, vector<8x128xf32>, vector<8x128xf32>, vector<8x128xf32>, vector<8x128xf32> -> vector<8x1152xf32>
    %147 = vector.extract_strided_slice %18 {offsets = [8, 0], sizes = [6, 128], strides = [1, 1]} : vector<16x128xf32> to vector<6x128xf32>
    %148 = vector.extract_strided_slice %17 {offsets = [8, 0], sizes = [7, 128], strides = [1, 1]} : vector<16x1152xf32> to vector<7x128xf32>
    %149 = vector.extract_strided_slice %148 {offsets = [0, 0], sizes = [6, 128], strides = [1, 1]} : vector<7x128xf32> to vector<6x128xf32>
    %150 = arith.mulf %147, %149 : vector<6x128xf32>
    %cst_36 = arith.constant dense<0.000000e+00> : vector<128xf32>
    %151 = vector.multi_reduction <add>, %150, %cst_36 [0] : vector<6x128xf32> to vector<128xf32>
    %152 = vector.shape_cast %151 : vector<128xf32> to vector<1x128xf32>
    %cst_37 = arith.constant 2.000000e+00 : f32
    %153 = vector.broadcast %cst_37 : f32 to vector<1x128xf32>
    %154 = arith.mulf %153, %152 : vector<1x128xf32>
    %155 = vector.extract_strided_slice %148 {offsets = [6, 0], sizes = [1, 128], strides = [1, 1]} : vector<7x128xf32> to vector<1x128xf32>
    %156 = arith.subf %154, %155 : vector<1x128xf32>
    %157 = vector.extract_strided_slice %17 {offsets = [8, 128], sizes = [7, 128], strides = [1, 1]} : vector<16x1152xf32> to vector<7x128xf32>
    %158 = vector.extract_strided_slice %157 {offsets = [0, 0], sizes = [6, 128], strides = [1, 1]} : vector<7x128xf32> to vector<6x128xf32>
    %159 = arith.mulf %147, %158 : vector<6x128xf32>
    %cst_38 = arith.constant dense<0.000000e+00> : vector<128xf32>
    %160 = vector.multi_reduction <add>, %159, %cst_38 [0] : vector<6x128xf32> to vector<128xf32>
    %161 = vector.shape_cast %160 : vector<128xf32> to vector<1x128xf32>
    %cst_39 = arith.constant 2.000000e+00 : f32
    %162 = vector.broadcast %cst_39 : f32 to vector<1x128xf32>
    %163 = arith.mulf %162, %161 : vector<1x128xf32>
    %164 = vector.extract_strided_slice %157 {offsets = [6, 0], sizes = [1, 128], strides = [1, 1]} : vector<7x128xf32> to vector<1x128xf32>
    %165 = arith.subf %163, %164 : vector<1x128xf32>
    %166 = vector.extract_strided_slice %17 {offsets = [8, 256], sizes = [7, 128], strides = [1, 1]} : vector<16x1152xf32> to vector<7x128xf32>
    %167 = vector.extract_strided_slice %166 {offsets = [0, 0], sizes = [6, 128], strides = [1, 1]} : vector<7x128xf32> to vector<6x128xf32>
    %168 = arith.mulf %147, %167 : vector<6x128xf32>
    %cst_40 = arith.constant dense<0.000000e+00> : vector<128xf32>
    %169 = vector.multi_reduction <add>, %168, %cst_40 [0] : vector<6x128xf32> to vector<128xf32>
    %170 = vector.shape_cast %169 : vector<128xf32> to vector<1x128xf32>
    %cst_41 = arith.constant 2.000000e+00 : f32
    %171 = vector.broadcast %cst_41 : f32 to vector<1x128xf32>
    %172 = arith.mulf %171, %170 : vector<1x128xf32>
    %173 = vector.extract_strided_slice %166 {offsets = [6, 0], sizes = [1, 128], strides = [1, 1]} : vector<7x128xf32> to vector<1x128xf32>
    %174 = arith.subf %172, %173 : vector<1x128xf32>
    %175 = vector.extract_strided_slice %17 {offsets = [8, 384], sizes = [7, 128], strides = [1, 1]} : vector<16x1152xf32> to vector<7x128xf32>
    %176 = vector.extract_strided_slice %175 {offsets = [0, 0], sizes = [6, 128], strides = [1, 1]} : vector<7x128xf32> to vector<6x128xf32>
    %177 = arith.mulf %147, %176 : vector<6x128xf32>
    %cst_42 = arith.constant dense<0.000000e+00> : vector<128xf32>
    %178 = vector.multi_reduction <add>, %177, %cst_42 [0] : vector<6x128xf32> to vector<128xf32>
    %179 = vector.shape_cast %178 : vector<128xf32> to vector<1x128xf32>
    %cst_43 = arith.constant 2.000000e+00 : f32
    %180 = vector.broadcast %cst_43 : f32 to vector<1x128xf32>
    %181 = arith.mulf %180, %179 : vector<1x128xf32>
    %182 = vector.extract_strided_slice %175 {offsets = [6, 0], sizes = [1, 128], strides = [1, 1]} : vector<7x128xf32> to vector<1x128xf32>
    %183 = arith.subf %181, %182 : vector<1x128xf32>
    %184 = vector.extract_strided_slice %17 {offsets = [8, 512], sizes = [7, 128], strides = [1, 1]} : vector<16x1152xf32> to vector<7x128xf32>
    %185 = vector.extract_strided_slice %184 {offsets = [0, 0], sizes = [6, 128], strides = [1, 1]} : vector<7x128xf32> to vector<6x128xf32>
    %186 = arith.mulf %147, %185 : vector<6x128xf32>
    %cst_44 = arith.constant dense<0.000000e+00> : vector<128xf32>
    %187 = vector.multi_reduction <add>, %186, %cst_44 [0] : vector<6x128xf32> to vector<128xf32>
    %188 = vector.shape_cast %187 : vector<128xf32> to vector<1x128xf32>
    %cst_45 = arith.constant 2.000000e+00 : f32
    %189 = vector.broadcast %cst_45 : f32 to vector<1x128xf32>
    %190 = arith.mulf %189, %188 : vector<1x128xf32>
    %191 = vector.extract_strided_slice %184 {offsets = [6, 0], sizes = [1, 128], strides = [1, 1]} : vector<7x128xf32> to vector<1x128xf32>
    %192 = arith.subf %190, %191 : vector<1x128xf32>
    %193 = vector.extract_strided_slice %17 {offsets = [8, 640], sizes = [7, 128], strides = [1, 1]} : vector<16x1152xf32> to vector<7x128xf32>
    %194 = vector.extract_strided_slice %193 {offsets = [0, 0], sizes = [6, 128], strides = [1, 1]} : vector<7x128xf32> to vector<6x128xf32>
    %195 = arith.mulf %147, %194 : vector<6x128xf32>
    %cst_46 = arith.constant dense<0.000000e+00> : vector<128xf32>
    %196 = vector.multi_reduction <add>, %195, %cst_46 [0] : vector<6x128xf32> to vector<128xf32>
    %197 = vector.shape_cast %196 : vector<128xf32> to vector<1x128xf32>
    %cst_47 = arith.constant 2.000000e+00 : f32
    %198 = vector.broadcast %cst_47 : f32 to vector<1x128xf32>
    %199 = arith.mulf %198, %197 : vector<1x128xf32>
    %200 = vector.extract_strided_slice %193 {offsets = [6, 0], sizes = [1, 128], strides = [1, 1]} : vector<7x128xf32> to vector<1x128xf32>
    %201 = arith.subf %199, %200 : vector<1x128xf32>
    %202 = vector.extract_strided_slice %17 {offsets = [8, 768], sizes = [7, 128], strides = [1, 1]} : vector<16x1152xf32> to vector<7x128xf32>
    %203 = vector.extract_strided_slice %202 {offsets = [0, 0], sizes = [6, 128], strides = [1, 1]} : vector<7x128xf32> to vector<6x128xf32>
    %204 = arith.mulf %147, %203 : vector<6x128xf32>
    %cst_48 = arith.constant dense<0.000000e+00> : vector<128xf32>
    %205 = vector.multi_reduction <add>, %204, %cst_48 [0] : vector<6x128xf32> to vector<128xf32>
    %206 = vector.shape_cast %205 : vector<128xf32> to vector<1x128xf32>
    %cst_49 = arith.constant 2.000000e+00 : f32
    %207 = vector.broadcast %cst_49 : f32 to vector<1x128xf32>
    %208 = arith.mulf %207, %206 : vector<1x128xf32>
    %209 = vector.extract_strided_slice %202 {offsets = [6, 0], sizes = [1, 128], strides = [1, 1]} : vector<7x128xf32> to vector<1x128xf32>
    %210 = arith.subf %208, %209 : vector<1x128xf32>
    %211 = vector.extract_strided_slice %17 {offsets = [8, 896], sizes = [7, 128], strides = [1, 1]} : vector<16x1152xf32> to vector<7x128xf32>
    %212 = vector.extract_strided_slice %211 {offsets = [0, 0], sizes = [6, 128], strides = [1, 1]} : vector<7x128xf32> to vector<6x128xf32>
    %213 = arith.mulf %147, %212 : vector<6x128xf32>
    %cst_50 = arith.constant dense<0.000000e+00> : vector<128xf32>
    %214 = vector.multi_reduction <add>, %213, %cst_50 [0] : vector<6x128xf32> to vector<128xf32>
    %215 = vector.shape_cast %214 : vector<128xf32> to vector<1x128xf32>
    %cst_51 = arith.constant 2.000000e+00 : f32
    %216 = vector.broadcast %cst_51 : f32 to vector<1x128xf32>
    %217 = arith.mulf %216, %215 : vector<1x128xf32>
    %218 = vector.extract_strided_slice %211 {offsets = [6, 0], sizes = [1, 128], strides = [1, 1]} : vector<7x128xf32> to vector<1x128xf32>
    %219 = arith.subf %217, %218 : vector<1x128xf32>
    %220 = vector.extract_strided_slice %17 {offsets = [8, 1024], sizes = [7, 128], strides = [1, 1]} : vector<16x1152xf32> to vector<7x128xf32>
    %221 = vector.extract_strided_slice %220 {offsets = [0, 0], sizes = [6, 128], strides = [1, 1]} : vector<7x128xf32> to vector<6x128xf32>
    %222 = arith.mulf %147, %221 : vector<6x128xf32>
    %cst_52 = arith.constant dense<0.000000e+00> : vector<128xf32>
    %223 = vector.multi_reduction <add>, %222, %cst_52 [0] : vector<6x128xf32> to vector<128xf32>
    %224 = vector.shape_cast %223 : vector<128xf32> to vector<1x128xf32>
    %cst_53 = arith.constant 2.000000e+00 : f32
    %225 = vector.broadcast %cst_53 : f32 to vector<1x128xf32>
    %226 = arith.mulf %225, %224 : vector<1x128xf32>
    %227 = vector.extract_strided_slice %220 {offsets = [6, 0], sizes = [1, 128], strides = [1, 1]} : vector<7x128xf32> to vector<1x128xf32>
    %228 = arith.subf %226, %227 : vector<1x128xf32>
    %229 = tpu.concatenate %156, %165, %174, %183, %192, %201, %210, %219, %228 in 0 : vector<1x128xf32>, vector<1x128xf32>, vector<1x128xf32>, vector<1x128xf32>, vector<1x128xf32>, vector<1x128xf32>, vector<1x128xf32>, vector<1x128xf32>, vector<1x128xf32> -> vector<9x128xf32>
    %230 = arith.addf %229, %19 : vector<9x128xf32>
    %c1 = arith.constant 1 : index
    %c0_54 = arith.constant 0 : index
    %231 = vector.load %arg4[%c1, %c0_54] : memref<2x128xf32, #tpu.memory_space<vmem>>, vector<1x128xf32>
    %232 = vector.broadcast %231 : vector<1x128xf32> to vector<9x128xf32>
    %233 = arith.subf %230, %232 : vector<9x128xf32>
    %cst_55 = arith.constant dense<0xFF800000> : vector<128xf32>
    %234 = vector.multi_reduction <maximumf>, %233, %cst_55 [0] : vector<9x128xf32> to vector<128xf32>
    %235 = vector.shape_cast %234 : vector<128xf32> to vector<1x128xf32>
    %236 = vector.broadcast %235 : vector<1x128xf32> to vector<9x128xf32>
    %237 = arith.subf %233, %236 : vector<9x128xf32>
    %238 = math.exp %237 : vector<9x128xf32>
    %cst_56 = arith.constant dense<0.000000e+00> : vector<128xf32>
    %239 = vector.multi_reduction <add>, %238, %cst_56 [0] : vector<9x128xf32> to vector<128xf32>
    %240 = vector.shape_cast %239 : vector<128xf32> to vector<1x128xf32>
    %241 = vector.broadcast %240 : vector<1x128xf32> to vector<9x128xf32>
    %242 = arith.divf %238, %241 : vector<9x128xf32>
    %243 = vector.extract_strided_slice %21 {offsets = [8, 0], sizes = [8, 128], strides = [1, 1]} : vector<16x128xf32> to vector<8x128xf32>
    %244 = vector.extract_strided_slice %242 {offsets = [0, 0], sizes = [1, 128], strides = [1, 1]} : vector<9x128xf32> to vector<1x128xf32>
    %245 = vector.broadcast %244 : vector<1x128xf32> to vector<8x128xf32>
    %246 = arith.mulf %243, %245 : vector<8x128xf32>
    %247 = vector.extract_strided_slice %242 {offsets = [1, 0], sizes = [1, 128], strides = [1, 1]} : vector<9x128xf32> to vector<1x128xf32>
    %248 = vector.broadcast %247 : vector<1x128xf32> to vector<8x128xf32>
    %249 = arith.mulf %243, %248 : vector<8x128xf32>
    %250 = vector.extract_strided_slice %242 {offsets = [2, 0], sizes = [1, 128], strides = [1, 1]} : vector<9x128xf32> to vector<1x128xf32>
    %251 = vector.broadcast %250 : vector<1x128xf32> to vector<8x128xf32>
    %252 = arith.mulf %243, %251 : vector<8x128xf32>
    %253 = vector.extract_strided_slice %242 {offsets = [3, 0], sizes = [1, 128], strides = [1, 1]} : vector<9x128xf32> to vector<1x128xf32>
    %254 = vector.broadcast %253 : vector<1x128xf32> to vector<8x128xf32>
    %255 = arith.mulf %243, %254 : vector<8x128xf32>
    %256 = vector.extract_strided_slice %242 {offsets = [4, 0], sizes = [1, 128], strides = [1, 1]} : vector<9x128xf32> to vector<1x128xf32>
    %257 = vector.broadcast %256 : vector<1x128xf32> to vector<8x128xf32>
    %258 = arith.mulf %243, %257 : vector<8x128xf32>
    %259 = vector.extract_strided_slice %242 {offsets = [5, 0], sizes = [1, 128], strides = [1, 1]} : vector<9x128xf32> to vector<1x128xf32>
    %260 = vector.broadcast %259 : vector<1x128xf32> to vector<8x128xf32>
    %261 = arith.mulf %243, %260 : vector<8x128xf32>
    %262 = vector.extract_strided_slice %242 {offsets = [6, 0], sizes = [1, 128], strides = [1, 1]} : vector<9x128xf32> to vector<1x128xf32>
    %263 = vector.broadcast %262 : vector<1x128xf32> to vector<8x128xf32>
    %264 = arith.mulf %243, %263 : vector<8x128xf32>
    %265 = vector.extract_strided_slice %242 {offsets = [7, 0], sizes = [1, 128], strides = [1, 1]} : vector<9x128xf32> to vector<1x128xf32>
    %266 = vector.broadcast %265 : vector<1x128xf32> to vector<8x128xf32>
    %267 = arith.mulf %243, %266 : vector<8x128xf32>
    %268 = vector.extract_strided_slice %242 {offsets = [8, 0], sizes = [1, 128], strides = [1, 1]} : vector<9x128xf32> to vector<1x128xf32>
    %269 = vector.broadcast %268 : vector<1x128xf32> to vector<8x128xf32>
    %270 = arith.mulf %243, %269 : vector<8x128xf32>
    %271 = tpu.concatenate %246, %249, %252, %255, %258, %261, %264, %267, %270 in 1 : vector<8x128xf32>, vector<8x128xf32>, vector<8x128xf32>, vector<8x128xf32>, vector<8x128xf32>, vector<8x128xf32>, vector<8x128xf32>, vector<8x128xf32>, vector<8x128xf32> -> vector<8x1152xf32>
    %272 = arith.extui %2 : i1 to i32
    %c0_i32_57 = arith.constant 0 : i32
    %273 = arith.cmpi ne, %272, %c0_i32_57 : i32
    scf.if %273 {
      %c0_67 = arith.constant 0 : index
      %c0_68 = arith.constant 0 : index
      %c0_69 = arith.constant 0 : index
      %295 = vector.load %arg9[%c0_67, %c0_68, %c0_69] : memref<2x9x128xf32, #tpu.memory_space<vmem>>, vector<1x9x128xf32>
      %296 = vector.shape_cast %295 : vector<1x9x128xf32> to vector<9x128xf32>
      %297 = vector.shape_cast %117 : vector<9x128xf32> to vector<1x9x128xf32>
      tpu.vector_store %arg9[%c0_67, %c0_68, %c0_69], %297 {strides = array<i32>} : memref<2x9x128xf32, #tpu.memory_space<vmem>>, vector<1x9x128xf32>,
      %c1_70 = arith.constant 1 : index
      %c0_71 = arith.constant 0 : index
      %c0_72 = arith.constant 0 : index
      %298 = vector.load %arg9[%c1_70, %c0_71, %c0_72] : memref<2x9x128xf32, #tpu.memory_space<vmem>>, vector<1x9x128xf32>
      %299 = vector.shape_cast %298 : vector<1x9x128xf32> to vector<9x128xf32>
      %300 = vector.shape_cast %242 : vector<9x128xf32> to vector<1x9x128xf32>
      tpu.vector_store %arg9[%c1_70, %c0_71, %c0_72], %300 {strides = array<i32>} : memref<2x9x128xf32, #tpu.memory_space<vmem>>, vector<1x9x128xf32>,
    } else {
    }
    %274 = tpu.concatenate %146, %271 in 0 : vector<8x1152xf32>, vector<8x1152xf32> -> vector<16x1152xf32>
    %275 = arith.truncf %274 : vector<16x1152xf32> to vector<16x1152xbf16>
    %cst_58 = arith.constant dense<0.000000e+00> : vector<16x128xf32>
    %276 = tpu.matmul %275, %11, %cst_58 {dimension_numbers = #tpu.dot_dimension_numbers<[1], [0], [0], [1], [0, 0, 1, 1], [], []>} : vector<16x1152xbf16>, vector<1152x128xbf16>, vector<16x128xf32> -> vector<16x128xf32>
    %c0_i32_59 = arith.constant 0 : i32
    %277 = arith.addi %1, %c0_i32_59 : i32
    %278 = arith.index_cast %277 : i32 to index
    %c0_60 = arith.constant 0 : index
    %c0_61 = arith.constant 0 : index
    %279 = vector.load %arg11[%278, %c0_60, %c0_61] : memref<1x16x128xf32, #tpu.memory_space<vmem>>, vector<1x16x128xf32>
    %280 = vector.shape_cast %279 : vector<1x16x128xf32> to vector<16x128xf32>
    %281 = arith.addf %280, %276 : vector<16x128xf32>
    %282 = arith.index_cast %277 : i32 to index
    %c0_62 = arith.constant 0 : index
    %c0_63 = arith.constant 0 : index
    %283 = vector.load %arg11[%282, %c0_62, %c0_63] : memref<1x16x128xf32, #tpu.memory_space<vmem>>, vector<1x16x128xf32>
    %284 = vector.shape_cast %283 : vector<1x16x128xf32> to vector<16x128xf32>
    %285 = vector.shape_cast %281 : vector<16x128xf32> to vector<1x16x128xf32>
    tpu.vector_store %arg11[%282, %c0_62, %c0_63], %285 {strides = array<i32>} : memref<1x16x128xf32, #tpu.memory_space<vmem>>, vector<1x16x128xf32>,
    %c1_i32 = arith.constant 1 : i32
    %286 = arith.cmpi eq, %arg1, %c1_i32 : i32
    %true = arith.constant true
    %287 = arith.xori %2, %true : i1
    %288 = arith.andi %286, %287 : i1
    %289 = arith.extui %288 : i1 to i32
    %c0_i32_64 = arith.constant 0 : i32
    %290 = arith.cmpi ne, %289, %c0_i32_64 : i32
    scf.if %290 {
      %c0_67 = arith.constant 0 : index
      %c6 = arith.constant 6 : index
      %c0_68 = arith.constant 0 : index
      %295 = vector.load %arg11[%c0_67, %c6, %c0_68] : memref<1x16x128xf32, #tpu.memory_space<vmem>>, vector<1x1x128xf32>
      %cst_69 = arith.constant 1.000000e-16 : f32
      %296 = vector.broadcast %cst_69 : f32 to vector<1x1x128xf32>
      %297 = arith.maximumf %295, %296 : vector<1x1x128xf32>
      %c0_70 = arith.constant 0 : index
      %c0_71 = arith.constant 0 : index
      %c0_72 = arith.constant 0 : index
      %298 = vector.load %arg11[%c0_70, %c0_71, %c0_72] : memref<1x16x128xf32, #tpu.memory_space<vmem>>, vector<1x6x128xf32>
      %299 = vector.broadcast %297 : vector<1x1x128xf32> to vector<1x6x128xf32>
      %300 = arith.divf %298, %299 : vector<1x6x128xf32>
      %c0_73 = arith.constant 0 : index
      %c0_74 = arith.constant 0 : index
      %c0_75 = arith.constant 0 : index
      %301 = vector.load %arg12[%c0_73, %c0_74, %c0_75] : memref<1x16x128xf32, #tpu.memory_space<vmem>>, vector<1x6x128xf32>
      tpu.vector_store %arg12[%c0_73, %c0_74, %c0_75], %300 {strides = array<i32>} : memref<1x16x128xf32, #tpu.memory_space<vmem>>, vector<1x6x128xf32>,
      %302 = arith.mulf %300, %300 : vector<1x6x128xf32>
      %cst_76 = arith.constant dense<0.000000e+00> : vector<1x128xf32>
      %303 = vector.multi_reduction <add>, %302, %cst_76 [1] : vector<1x6x128xf32> to vector<1x128xf32>
      %304 = vector.shape_cast %303 : vector<1x128xf32> to vector<1x1x128xf32>
      %c0_77 = arith.constant 0 : index
      %c6_78 = arith.constant 6 : index
      %c0_79 = arith.constant 0 : index
      %305 = vector.load %arg12[%c0_77, %c6_78, %c0_79] : memref<1x16x128xf32, #tpu.memory_space<vmem>>, vector<1x1x128xf32>
      tpu.vector_store %arg12[%c0_77, %c6_78, %c0_79], %304 {strides = array<i32>} : memref<1x16x128xf32, #tpu.memory_space<vmem>>, vector<1x1x128xf32>,
      %c0_80 = arith.constant 0 : index
      %c14 = arith.constant 14 : index
      %c0_81 = arith.constant 0 : index
      %306 = vector.load %arg11[%c0_80, %c14, %c0_81] : memref<1x16x128xf32, #tpu.memory_space<vmem>>, vector<1x1x128xf32>
      %cst_82 = arith.constant 1.000000e-16 : f32
      %307 = vector.broadcast %cst_82 : f32 to vector<1x1x128xf32>
      %308 = arith.maximumf %306, %307 : vector<1x1x128xf32>
      %c0_83 = arith.constant 0 : index
      %c8 = arith.constant 8 : index
      %c0_84 = arith.constant 0 : index
      %309 = vector.load %arg11[%c0_83, %c8, %c0_84] : memref<1x16x128xf32, #tpu.memory_space<vmem>>, vector<1x6x128xf32>
      %310 = vector.broadcast %308 : vector<1x1x128xf32> to vector<1x6x128xf32>
      %311 = arith.divf %309, %310 : vector<1x6x128xf32>
      %c0_85 = arith.constant 0 : index
      %c8_86 = arith.constant 8 : index
      %c0_87 = arith.constant 0 : index
      %312 = vector.load %arg12[%c0_85, %c8_86, %c0_87] : memref<1x16x128xf32, #tpu.memory_space<vmem>>, vector<1x6x128xf32>
      tpu.vector_store %arg12[%c0_85, %c8_86, %c0_87], %311 {strides = array<i32>} : memref<1x16x128xf32, #tpu.memory_space<vmem>>, vector<1x6x128xf32>,
      %313 = arith.mulf %311, %311 : vector<1x6x128xf32>
      %cst_88 = arith.constant dense<0.000000e+00> : vector<1x128xf32>
      %314 = vector.multi_reduction <add>, %313, %cst_88 [1] : vector<1x6x128xf32> to vector<1x128xf32>
      %315 = vector.shape_cast %314 : vector<1x128xf32> to vector<1x1x128xf32>
      %c0_89 = arith.constant 0 : index
      %c14_90 = arith.constant 14 : index
      %c0_91 = arith.constant 0 : index
      %316 = vector.load %arg12[%c0_89, %c14_90, %c0_91] : memref<1x16x128xf32, #tpu.memory_space<vmem>>, vector<1x1x128xf32>
      tpu.vector_store %arg12[%c0_89, %c14_90, %c0_91], %315 {strides = array<i32>} : memref<1x16x128xf32, #tpu.memory_space<vmem>>, vector<1x1x128xf32>,
    } else {
    }
    %c1_i32_65 = arith.constant 1 : i32
    %291 = arith.cmpi eq, %arg1, %c1_i32_65 : i32
    %292 = arith.andi %291, %2 : i1
    %293 = arith.extui %292 : i1 to i32
    %c0_i32_66 = arith.constant 0 : i32
    %294 = arith.cmpi ne, %293, %c0_i32_66 : i32
    scf.if %294 {
      %c0_67 = arith.constant 0 : index
      %c6 = arith.constant 6 : index
      %c0_68 = arith.constant 0 : index
      %295 = vector.load %arg11[%c0_67, %c6, %c0_68] : memref<1x16x128xf32, #tpu.memory_space<vmem>>, vector<1x1x128xf32>
      %cst_69 = arith.constant 1.000000e-16 : f32
      %296 = vector.broadcast %cst_69 : f32 to vector<1x1x128xf32>
      %297 = arith.maximumf %295, %296 : vector<1x1x128xf32>
      %c0_70 = arith.constant 0 : index
      %c0_71 = arith.constant 0 : index
      %c0_72 = arith.constant 0 : index
      %298 = vector.load %arg11[%c0_70, %c0_71, %c0_72] : memref<1x16x128xf32, #tpu.memory_space<vmem>>, vector<1x4x128xf32>
      %299 = vector.broadcast %297 : vector<1x1x128xf32> to vector<1x4x128xf32>
      %300 = arith.divf %298, %299 : vector<1x4x128xf32>
      %c0_73 = arith.constant 0 : index
      %c0_74 = arith.constant 0 : index
      %c0_75 = arith.constant 0 : index
      %c0_76 = arith.constant 0 : index
      %301 = vector.load %arg10[%c0_73, %c0_74, %c0_75, %c0_76] : memref<2x1x4x128xf32, #tpu.memory_space<vmem>>, vector<1x1x4x128xf32>
      %302 = vector.shape_cast %301 : vector<1x1x4x128xf32> to vector<1x4x128xf32>
      %303 = vector.shape_cast %300 : vector<1x4x128xf32> to vector<1x1x4x128xf32>
      tpu.vector_store %arg10[%c0_73, %c0_74, %c0_75, %c0_76], %303 {strides = array<i32>} : memref<2x1x4x128xf32, #tpu.memory_space<vmem>>, vector<1x1x4x128xf32>,
      %c0_77 = arith.constant 0 : index
      %c14 = arith.constant 14 : index
      %c0_78 = arith.constant 0 : index
      %304 = vector.load %arg11[%c0_77, %c14, %c0_78] : memref<1x16x128xf32, #tpu.memory_space<vmem>>, vector<1x1x128xf32>
      %cst_79 = arith.constant 1.000000e-16 : f32
      %305 = vector.broadcast %cst_79 : f32 to vector<1x1x128xf32>
      %306 = arith.maximumf %304, %305 : vector<1x1x128xf32>
      %c0_80 = arith.constant 0 : index
      %c8 = arith.constant 8 : index
      %c0_81 = arith.constant 0 : index
      %307 = vector.load %arg11[%c0_80, %c8, %c0_81] : memref<1x16x128xf32, #tpu.memory_space<vmem>>, vector<1x4x128xf32>
      %308 = vector.broadcast %306 : vector<1x1x128xf32> to vector<1x4x128xf32>
      %309 = arith.divf %307, %308 : vector<1x4x128xf32>
      %c1_82 = arith.constant 1 : index
      %c0_83 = arith.constant 0 : index
      %c0_84 = arith.constant 0 : index
      %c0_85 = arith.constant 0 : index
      %310 = vector.load %arg10[%c1_82, %c0_83, %c0_84, %c0_85] : memref<2x1x4x128xf32, #tpu.memory_space<vmem>>, vector<1x1x4x128xf32>
      %311 = vector.shape_cast %310 : vector<1x1x4x128xf32> to vector<1x4x128xf32>
      %312 = vector.shape_cast %309 : vector<1x4x128xf32> to vector<1x1x4x128xf32>
      tpu.vector_store %arg10[%c1_82, %c0_83, %c0_84, %c0_85], %312 {strides = array<i32>} : memref<2x1x4x128xf32, #tpu.memory_space<vmem>>, vector<1x1x4x128xf32>,
    } else {
    }
    return
  }
  func.func @transform_0(%arg0: i32, %arg1: i32, %arg2: memref<2xi32, #tpu.memory_space<smem>>) -> (i32, i32) {
    %c0_i32 = arith.constant 0 : i32
    %c0_i32_0 = arith.constant 0 : i32
    return %c0_i32, %arg1 : i32, i32
  }
  func.func @transform_1(%arg0: i32, %arg1: i32, %arg2: memref<2xi32, #tpu.memory_space<smem>>) -> (i32, i32) {
    %c0_i32 = arith.constant 0 : i32
    %c0_i32_0 = arith.constant 0 : i32
    return %c0_i32, %arg1 : i32, i32
  }
  func.func @transform_2(%arg0: i32, %arg1: i32, %arg2: memref<2xi32, #tpu.memory_space<smem>>) -> (i32, i32) {
    %c0_i32 = arith.constant 0 : i32
    %c0_i32_0 = arith.constant 0 : i32
    return %c0_i32, %arg1 : i32, i32
  }
  func.func @transform_3(%arg0: i32, %arg1: i32, %arg2: memref<2xi32, #tpu.memory_space<smem>>) -> (i32, i32, i32) {
    %c0_i32 = arith.constant 0 : i32
    %c0_i32_0 = arith.constant 0 : i32
    %c0_i32_1 = arith.constant 0 : i32
    %c0_i32_2 = arith.constant 0 : i32
    return %c0_i32, %c0_i32_0, %c0_i32_1 : i32, i32, i32
  }
  func.func @transform_4(%arg0: i32, %arg1: i32, %arg2: memref<2xi32, #tpu.memory_space<smem>>) -> (i32, i32) {
    %c0_i32 = arith.constant 0 : i32
    %c0_i32_0 = arith.constant 0 : i32
    return %arg1, %c0_i32 : i32, i32
  }
  func.func @transform_5(%arg0: i32, %arg1: i32, %arg2: memref<2xi32, #tpu.memory_space<smem>>) -> (i32, i32) {
    %c0_i32 = arith.constant 0 : i32
    %c0_i32_0 = arith.constant 0 : i32
    return %c0_i32, %arg1 : i32, i32
  }
  func.func @transform_6(%arg0: i32, %arg1: i32, %arg2: memref<2xi32, #tpu.memory_space<smem>>) -> (i32, i32, i32) {
    %c0_i32 = arith.constant 0 : i32
    %c0_i32_0 = arith.constant 0 : i32
    %c0_i32_1 = arith.constant 0 : i32
    return %c0_i32, %c0_i32_0, %arg1 : i32, i32, i32
  }
  func.func @transform_7(%arg0: i32, %arg1: i32, %arg2: memref<2xi32, #tpu.memory_space<smem>>) -> (i32, i32, i32, i32) {
    %c0_i32 = arith.constant 0 : i32
    %c0_i32_0 = arith.constant 0 : i32
    %c0_i32_1 = arith.constant 0 : i32
    %c0_i32_2 = arith.constant 0 : i32
    %c0_i32_3 = arith.constant 0 : i32
    return %c0_i32, %c0_i32_0, %c0_i32_1, %c0_i32_2 : i32, i32, i32, i32
  }
}

</mosaic_0001>

<llo_original>
// kernel: tpu_custom_call.1
$region0: #{tpu_custom_call.1}
  #allocation0 [shape = 'u32[]', space=smem, size = 0x4, offset = 0x4, fixed_abs, tag = 'smem constant byte address 0x4 - core index']
  #allocation1 [shape = 'u32[72,128]{1,0:T(1,128)}', space=vmem, size = 0x9000, scoped, tag = 'internal scratch']
  #allocation2 [shape = 'f32[1,16,128]{2,1,0:T(8,128)}', space=vmem, size = 0x2000, scoped, tag = 'scratch operand']
  #allocation3 [shape = 'f32[1,16,128]{2,1,0:T(8,128)}', space=vmem, size = 0x2000, scoped, tag = 'scratch operand']
  #allocation4 [shape = 's32[1]{0}', space=sflag, size = 0x4, scoped, tag = 'scoped memory for tpu_custom_call.1']
  #allocation5 [shape = 'u8[512]{0}', space=smem, size = 0x200, scoped, tag = 'prefetched SMEM operand 0']
  %s0 = inlined_call_operand.hbm [shape: s32[2], index: 0, kind: input, shape index: {}]
  %s1 = inlined_call_operand.hbm [shape: f32[16,256], index: 1, kind: input, shape index: {}]
  %s2 = inlined_call_operand.hbm [shape: f32[2,256], index: 2, kind: input, shape index: {}]
  %s3 = inlined_call_operand.hbm [shape: f32[16,256], index: 3, kind: input, shape index: {}]
  %s4 = inlined_call_operand.hbm [shape: f32[1,16,128], index: 4, kind: input, shape index: {}]
  %s5 = inlined_call_operand.hbm [shape: bf16[2304,128], index: 5, kind: input, shape index: {}]
  %s6 = inlined_call_operand.hbm [shape: f32[9,256], index: 6, kind: input, shape index: {}]
  %s7 = inlined_call_operand.vmem [shape: f32[2,9,256], index: 7, kind: output, shape index: {0}]
  %s8 = inlined_call_operand.hbm [shape: f32[2,1,4,128], index: 8, kind: output, shape index: {1}]
  %9 = xla_tuple %s7, %s8
  %s10 = sld [smem:[#allocation0]]
  $region143: #{tpu_custom_call.1} parent=0
    _
  %s12 = ssub.s32 1, %s10
  %s13 = scalar_select 0, %s12, %s10
  %s15 = sshll.u32 %s0, 4
  %s16 = int_to_ptr.hbm [resolvable:$true] %s15
  %18 = dma.hbm_to_smem %s16, 16, [#allocation5], [#allocation4]
  %20 = dma.done [#allocation4], 16
  %21 = sfence
  $region1: #{tpu_custom_call.1} parent=0
    #allocation6 [shape = 'u8[16384]{0}', space=vmem, size = 0x4000, scoped, tag = 'input window, operand 1']
    #allocation7 [shape = 's32[2]{0}', space=sflag, size = 0x8, scoped, tag = 'scoped memory for tpu_custom_call.1']
    #allocation8 [shape = 's32[2]{0}', space=sflag, size = 0x8, scoped, tag = 'scoped memory for tpu_custom_call.1']
    #allocation9 [shape = 'u8[2048]{0}', space=vmem, size = 0x800, scoped, tag = 'input window, operand 2']
    #allocation10 [shape = 's32[2]{0}', space=sflag, size = 0x8, scoped, tag = 'scoped memory for tpu_custom_call.1']
    #allocation11 [shape = 'u8[16384]{0}', space=vmem, size = 0x4000, scoped, tag = 'input window, operand 3']
    #allocation12 [shape = 'u8[8192]{0}', space=vmem, size = 0x2000, scoped, tag = 'input window, operand 4, single buffered']
    #allocation13 [shape = 's32[1]{0}', space=sflag, size = 0x4, scoped, tag = 'scoped memory for tpu_custom_call.1']
    #allocation14 [shape = 'u8[589824]{0}', space=vmem, size = 0x90000, scoped, tag = 'input window, operand 5']
    #allocation15 [shape = 'u8[16384]{0}', space=vmem, size = 0x4000, scoped, tag = 'input window, operand 6']
    #allocation16 [shape = 'u8[32768]{0}', space=vmem, size = 0x8000, scoped, tag = 'output window, operand 0']
    #allocation17 [shape = 'u8[4096]{0}', space=vmem, size = 0x1000, scoped, tag = 'output window, operand 1, single buffered']
    %22 = vsyncpa [#allocation7], 0
    %s23 = scalar_lea.sflag [#allocation7], 1
    %24 = vsyncpa %s23, 0
    %25 = vsyncpa [#allocation10], 0
    %s26 = scalar_lea.sflag [#allocation10], 1
    %27 = vsyncpa %s26, 0
    %28 = vsyncpa [#allocation13], 0
    %29 = vsyncpa [#allocation8], 0
    loop: start=0, step=1, limit=22
    $region2: #{tpu_custom_call.1} parent=1 // loop_pre_header
      _
    $region3: #{tpu_custom_call.1} parent=1 // loop_header
      %s31 = sphi 0, %s35
      %p32 = scmp.ge.s32.totalorder %s31, 22
      %s38 = sphi 0, %s50
      %s39 = sphi 0, %s46
      %s40 = sphi 0, %s38
      %s41 = sphi 0, %s39
      %s42 = sphi 0, %s40
      %s43 = sphi 0, %s41
      %s53 = sphi 0, %s55
      %s56 = sphi 0, %s53
      %s57 = sphi 0, %s56
      %s73 = sphi 0, %s57
      %s79 = sphi 0, %s81
      %s82 = sphi 0, %s79
      %s83 = sphi 0, %s82
      %s99 = sphi 0, %s83
      %s105 = sphi 0, %s107
      %s108 = sphi 0, %s105
      %s109 = sphi 0, %s108
      %s125 = sphi 0, %s109
      %s129 = sphi 0, %s129
      %s131 = sphi 0, %s129
      %s132 = sphi 0, %s131
      %s146 = sphi 0, %s132
      %s152 = sphi 0, %s154
      %s155 = sphi 0, %s152
      %s156 = sphi 0, %s155
      %s172 = sphi 0, %s156
      %s178 = sphi 0, %s180
      %s181 = sphi 0, %s178
      %s182 = sphi 0, %s181
      %s198 = sphi 0, %s182
      %s204 = sphi 0, %s206
      %s207 = sphi 0, %s204
      %s208 = sphi 0, %s207
      %s224 = sphi 0, %s208
      %s228 = sphi 0, %s228
      %s230 = sphi 0, %s228
      %s231 = sphi 0, %s230
      %s245 = sphi 0, %s231
    $region4: #{tpu_custom_call.1} parent=1 // loop_header_branch
      %34 = sbr.rel (%p32) target = $region8
    $region5: #{tpu_custom_call.1} parent=1 // loop_body
      %s36 = ssub.s32 %s31, 1
      %s37 = ssub.s32 %s31, 2
      %s44 = sadd.s32 1, %s39
      %p45 = scmp.ge.s32.totalorder %s44, 2
      %s46 = scalar_select %p45, 0, %s44
      %s47 = sadd.s32 1, %s38
      %s48 = scalar_select %p45, %s47, %s38
      %p49 = scmp.ge.s32.totalorder %s48, 10
      %s50 = scalar_select %p49, 0, %s48
      %s51 = ssub.s32 %s39, %s46
      %p52 = scmp.eq.s32.totalorder %s51, 0
      %s54 = sadd.s32 %s53, 1
      %s55 = scalar_select %p52, %s53, %s54
      %p58 = pneg %p52
      %p59 = scmp.eq.s32.totalorder %s31, 19
      %p60 = por %p58, %p59
      %p61 = scmp.ne.s32.totalorder %s53, %s56
      %p62 = scmp.eq.s32.totalorder %s31, 0
      %p63 = por %p61, %p62
      %p64 = scmp.ne.s32.totalorder %s53, %s56
      %p65 = scmp.eq.s32.totalorder %s36, 19
      %p66 = por %p64, %p65
      %p67 = scmp.ne.s32.totalorder %s56, %s57
      %p68 = scmp.eq.s32.totalorder %s36, 0
      %p69 = por %p67, %p68
      %p70 = scmp.ne.s32.totalorder %s56, %s57
      %p71 = scmp.eq.s32.totalorder %s37, 19
      %p72 = por %p70, %p71
      %p74 = scmp.ne.s32.totalorder %s57, %s73
      %p75 = scmp.eq.s32.totalorder %s37, 0
      %p76 = por %p74, %p75
      %s77 = ssub.s32 %s39, %s46
      %p78 = scmp.eq.s32.totalorder %s77, 0
      %s80 = sadd.s32 %s79, 1
      %s81 = scalar_select %p78, %s79, %s80
      %p84 = pneg %p78
      %p85 = scmp.eq.s32.totalorder %s31, 19
      %p86 = por %p84, %p85
      %p87 = scmp.ne.s32.totalorder %s79, %s82
      %p88 = scmp.eq.s32.totalorder %s31, 0
      %p89 = por %p87, %p88
      %p90 = scmp.ne.s32.totalorder %s79, %s82
      %p91 = scmp.eq.s32.totalorder %s36, 19
      %p92 = por %p90, %p91
      %p93 = scmp.ne.s32.totalorder %s82, %s83
      %p94 = scmp.eq.s32.totalorder %s36, 0
      %p95 = por %p93, %p94
      %p96 = scmp.ne.s32.totalorder %s82, %s83
      %p97 = scmp.eq.s32.totalorder %s37, 19
      %p98 = por %p96, %p97
      %p100 = scmp.ne.s32.totalorder %s83, %s99
      %p101 = scmp.eq.s32.totalorder %s37, 0
      %p102 = por %p100, %p101
      %s103 = ssub.s32 %s39, %s46
      %p104 = scmp.eq.s32.totalorder %s103, 0
      %s106 = sadd.s32 %s105, 1
      %s107 = scalar_select %p104, %s105, %s106
      %p110 = pneg %p104
      %p111 = scmp.eq.s32.totalorder %s31, 19
      %p112 = por %p110, %p111
      %p113 = scmp.ne.s32.totalorder %s105, %s108
      %p114 = scmp.eq.s32.totalorder %s31, 0
      %p115 = por %p113, %p114
      %p116 = scmp.ne.s32.totalorder %s105, %s108
      %p117 = scmp.eq.s32.totalorder %s36, 19
      %p118 = por %p116, %p117
      %p119 = scmp.ne.s32.totalorder %s108, %s109
      %p120 = scmp.eq.s32.totalorder %s36, 0
      %p121 = por %p119, %p120
      %p122 = scmp.ne.s32.totalorder %s108, %s109
      %p123 = scmp.eq.s32.totalorder %s37, 19
      %p124 = por %p122, %p123
      %p126 = scmp.ne.s32.totalorder %s109, %s125
      %p127 = scmp.eq.s32.totalorder %s37, 0
      %p128 = por %p126, %p127
      %s130 = sadd.s32 %s129, 1
      %p133 = scmp.eq.s32.totalorder %s31, 19
      %p134 = scmp.ne.s32.totalorder %s129, %s131
      %p135 = scmp.eq.s32.totalorder %s31, 0
      %p136 = por %p134, %p135
      %p137 = scmp.ne.s32.totalorder %s129, %s131
      %p138 = scmp.eq.s32.totalorder %s36, 19
      %p139 = por %p137, %p138
      %p140 = scmp.ne.s32.totalorder %s131, %s132
      %p141 = scmp.eq.s32.totalorder %s36, 0
      %p142 = por %p140, %p141
      %p143 = scmp.ne.s32.totalorder %s131, %s132
      %p144 = scmp.eq.s32.totalorder %s37, 19
      %p145 = por %p143, %p144
      %p147 = scmp.ne.s32.totalorder %s132, %s146
      %p148 = scmp.eq.s32.totalorder %s37, 0
      %p149 = por %p147, %p148
      %s150 = ssub.s32 %s39, %s46
      %p151 = scmp.eq.s32.totalorder %s150, 0
      %s153 = sadd.s32 %s152, 1
      %s154 = scalar_select %p151, %s152, %s153
      %p157 = pneg %p151
      %p158 = scmp.eq.s32.totalorder %s31, 19
      %p159 = por %p157, %p158
      %p160 = scmp.ne.s32.totalorder %s152, %s155
      %p161 = scmp.eq.s32.totalorder %s31, 0
      %p162 = por %p160, %p161
      %p163 = scmp.ne.s32.totalorder %s152, %s155
      %p164 = scmp.eq.s32.totalorder %s36, 19
      %p165 = por %p163, %p164
      %p166 = scmp.ne.s32.totalorder %s155, %s156
      %p167 = scmp.eq.s32.totalorder %s36, 0
      %p168 = por %p166, %p167
      %p169 = scmp.ne.s32.totalorder %s155, %s156
      %p170 = scmp.eq.s32.totalorder %s37, 19
      %p171 = por %p169, %p170
      %p173 = scmp.ne.s32.totalorder %s156, %s172
      %p174 = scmp.eq.s32.totalorder %s37, 0
      %p175 = por %p173, %p174
      %s176 = ssub.s32 %s39, %s46
      %p177 = scmp.eq.s32.totalorder %s176, 0
      %s179 = sadd.s32 %s178, 1
      %s180 = scalar_select %p177, %s178, %s179
      %p183 = pneg %p177
      %p184 = scmp.eq.s32.totalorder %s31, 19
      %p185 = por %p183, %p184
      %p186 = scmp.ne.s32.totalorder %s178, %s181
      %p187 = scmp.eq.s32.totalorder %s31, 0
      %p188 = por %p186, %p187
      %p189 = scmp.ne.s32.totalorder %s178, %s181
      %p190 = scmp.eq.s32.totalorder %s36, 19
      %p191 = por %p189, %p190
      %p192 = scmp.ne.s32.totalorder %s181, %s182
      %p193 = scmp.eq.s32.totalorder %s36, 0
      %p194 = por %p192, %p193
      %p195 = scmp.ne.s32.totalorder %s181, %s182
      %p196 = scmp.eq.s32.totalorder %s37, 19
      %p197 = por %p195, %p196
      %p199 = scmp.ne.s32.totalorder %s182, %s198
      %p200 = scmp.eq.s32.totalorder %s37, 0
      %p201 = por %p199, %p200
      %s202 = ssub.s32 %s39, %s46
      %p203 = scmp.eq.s32.totalorder %s202, 0
      %s205 = sadd.s32 %s204, 1
      %s206 = scalar_select %p203, %s204, %s205
      %p209 = pneg %p203
      %p210 = scmp.eq.s32.totalorder %s31, 19
      %p211 = por %p209, %p210
      %p212 = scmp.ne.s32.totalorder %s204, %s207
      %p213 = scmp.eq.s32.totalorder %s31, 0
      %p214 = por %p212, %p213
      %p215 = scmp.ne.s32.totalorder %s204, %s207
      %p216 = scmp.eq.s32.totalorder %s36, 19
      %p217 = por %p215, %p216
      %p218 = scmp.ne.s32.totalorder %s207, %s208
      %p219 = scmp.eq.s32.totalorder %s36, 0
      %p220 = por %p218, %p219
      %p221 = scmp.ne.s32.totalorder %s207, %s208
      %p222 = scmp.eq.s32.totalorder %s37, 19
      %p223 = por %p221, %p222
      %p225 = scmp.ne.s32.totalorder %s208, %s224
      %p226 = scmp.eq.s32.totalorder %s37, 0
      %p227 = por %p225, %p226
      %s229 = sadd.s32 %s228, 1
      %p232 = scmp.eq.s32.totalorder %s31, 19
      %p233 = scmp.ne.s32.totalorder %s228, %s230
      %p234 = scmp.eq.s32.totalorder %s31, 0
      %p235 = por %p233, %p234
      %p236 = scmp.ne.s32.totalorder %s228, %s230
      %p237 = scmp.eq.s32.totalorder %s36, 19
      %p238 = por %p236, %p237
      %p239 = scmp.ne.s32.totalorder %s230, %s231
      %p240 = scmp.eq.s32.totalorder %s36, 0
      %p241 = por %p239, %p240
      %p242 = scmp.ne.s32.totalorder %s230, %s231
      %p243 = scmp.eq.s32.totalorder %s37, 19
      %p244 = por %p242, %p243
      %p246 = scmp.ne.s32.totalorder %s231, %s245
      %p247 = scmp.eq.s32.totalorder %s37, 0
      %p248 = por %p246, %p247
      %p249 = scmp.le.s32.totalorder 1, %s31
      %p250 = scmp.lt.s32.totalorder %s31, 21
      %p251 = pnand %p249, %p250
      %p252 = pneg %p251
      // Predicated region
      $region9: #{tpu_custom_call.1} parent=5 // pred_check
        _
      $region10: #{tpu_custom_call.1} parent=5 // pred_check_branch
        %254 = sbr.rel (%p251) target = $region12
      $region11: #{tpu_custom_call.1} parent=5 // pred_region
        %s255 = ssub.s32 %s31, 1
        // Predicated region
        $region13: #{tpu_custom_call.1} parent=11 // pred_check
          %p256 = pneg %p142
        $region14: #{tpu_custom_call.1} parent=11 // pred_check_branch
          %258 = sbr.rel (%p256) target = $region16
        $region15: #{tpu_custom_call.1} parent=11 // pred_region
          %260 = vsyncadd [#allocation13], 0
          %s261 = sshll.u32 %s4, 4
          %s262 = int_to_ptr.hbm [resolvable:$true] %s261
          %s263 = sshll.u32 [#allocation12], 4
          %s264 = int_to_ptr.vmem [resolvable:$true] %s263
          %269 = dma.hbm_to_vmem [thread:$0]  %s262, 256, %s264, [#allocation13], 128, 128, 8
        $region16: #{tpu_custom_call.1} parent=11 // pred_fallthru
          _
      $region12: #{tpu_custom_call.1} parent=5 // pred_fallthru
        _
      %p270 = scmp.lt.s32.totalorder %s31, 20
      // Predicated region
      $region17: #{tpu_custom_call.1} parent=5 // pred_check
        %p271 = pneg %p270
      $region18: #{tpu_custom_call.1} parent=5 // pred_check_branch
        %273 = sbr.rel (%p271) target = $region20
      $region19: #{tpu_custom_call.1} parent=5 // pred_region
        // Predicated region
        $region21: #{tpu_custom_call.1} parent=19 // pred_check
          %p274 = pneg %p63
        $region22: #{tpu_custom_call.1} parent=19 // pred_check_branch
          %276 = sbr.rel (%p274) target = $region24
        $region23: #{tpu_custom_call.1} parent=19 // pred_region
          %s277 = sand.u32 %s31, 1
          %s278 = scalar_lea.sflag [#allocation7], %s277
          %s279 = sand.u32 %s53, 1
          %s280 = smul.addr %s279, 16
          %s281 = scalar_lea.vmem [#allocation6], %s280
          %283 = vsyncadd %s278, 0
          %s284 = smul.addr %s39, 8
          %s285 = scalar_lea.hbm %s1, %s284
          %s286 = sshll.u32 %s285, 4
          %s287 = int_to_ptr.hbm [resolvable:$true] %s286
          %s288 = sshll.u32 %s281, 4
          %s289 = int_to_ptr.vmem [resolvable:$true] %s288
          %294 = dma.hbm_to_vmem [thread:$0]  %s287, 256, %s289, %s278, 256, 128, 8
        $region24: #{tpu_custom_call.1} parent=19 // pred_fallthru
          _
        // Predicated region
        $region25: #{tpu_custom_call.1} parent=19 // pred_check
          %p295 = pneg %p89
        $region26: #{tpu_custom_call.1} parent=19 // pred_check_branch
          %297 = sbr.rel (%p295) target = $region28
        $region27: #{tpu_custom_call.1} parent=19 // pred_region
          %s298 = sand.u32 %s31, 1
          %s299 = scalar_lea.sflag [#allocation10], %s298
          %s300 = sand.u32 %s79, 1
          %s301 = smul.addr %s300, 2
          %s302 = scalar_lea.vmem [#allocation9], %s301
          %304 = vsyncadd %s299, 0
          %s305 = smul.addr %s39, 2
          %s306 = scalar_lea.hbm %s2, %s305
          %s308 = sshll.u32 %s306, 4
          %s309 = int_to_ptr.hbm [resolvable:$true] %s308
          %s310 = sshll.u32 %s302, 4
          %s311 = int_to_ptr.vmem [resolvable:$true] %s310
          %313 = dma.hbm_to_vmem [thread:$0]  %s309, 32, %s311, %s299
        $region28: #{tpu_custom_call.1} parent=19 // pred_fallthru
          _
        // Predicated region
        $region29: #{tpu_custom_call.1} parent=19 // pred_check
          %p314 = pneg %p115
        $region30: #{tpu_custom_call.1} parent=19 // pred_check_branch
          %316 = sbr.rel (%p314) target = $region32
        $region31: #{tpu_custom_call.1} parent=19 // pred_region
          %s317 = sand.u32 %s31, 1
          %s318 = scalar_lea.sflag [#allocation10], %s317
          %s319 = sand.u32 %s105, 1
          %s320 = smul.addr %s319, 16
          %s321 = scalar_lea.vmem [#allocation11], %s320
          %323 = vsyncadd %s318, 0
          %s324 = smul.addr %s39, 8
          %s325 = scalar_lea.hbm %s3, %s324
          %s326 = sshll.u32 %s325, 4
          %s327 = int_to_ptr.hbm [resolvable:$true] %s326
          %s328 = sshll.u32 %s321, 4
          %s329 = int_to_ptr.vmem [resolvable:$true] %s328
          %334 = dma.hbm_to_vmem [thread:$0]  %s327, 256, %s329, %s318, 256, 128, 8
        $region32: #{tpu_custom_call.1} parent=19 // pred_fallthru
          _
        // Predicated region
        $region33: #{tpu_custom_call.1} parent=19 // pred_check
          %p335 = pneg %p162
        $region34: #{tpu_custom_call.1} parent=19 // pred_check_branch
          %337 = sbr.rel (%p335) target = $region36
        $region35: #{tpu_custom_call.1} parent=19 // pred_region
          %s338 = sand.u32 %s31, 1
          %s339 = scalar_lea.sflag [#allocation7], %s338
          %s340 = sand.u32 %s152, 1
          %s341 = smul.addr %s340, 576
          %s342 = scalar_lea.vmem [#allocation14], %s341
          %s343 = smul.u32 144, %s39
          %345 = vsyncadd %s339, 0
          %s346 = smul.addr %s343, 4
          %s347 = scalar_lea.hbm %s5, %s346
          %s348 = sshll.u32 %s347, 4
          %s349 = int_to_ptr.hbm [resolvable:$true] %s348
          %s350 = sshll.u32 %s342, 4
          %s351 = int_to_ptr.vmem [resolvable:$true] %s350
          %356 = dma.hbm_to_vmem [thread:$0]  %s349, 9216, %s351, %s339, 64, 64, 4
        $region36: #{tpu_custom_call.1} parent=19 // pred_fallthru
          _
        // Predicated region
        $region37: #{tpu_custom_call.1} parent=19 // pred_check
          %p357 = pneg %p188
        $region38: #{tpu_custom_call.1} parent=19 // pred_check_branch
          %359 = sbr.rel (%p357) target = $region40
        $region39: #{tpu_custom_call.1} parent=19 // pred_region
          %s360 = sand.u32 %s31, 1
          %s361 = scalar_lea.sflag [#allocation10], %s360
          %s362 = sand.u32 %s178, 1
          %s363 = smul.addr %s362, 16
          %s364 = scalar_lea.vmem [#allocation15], %s363
          %366 = vsyncadd %s361, 0
          %s367 = smul.addr %s39, 8
          %s368 = scalar_lea.hbm %s6, %s367
          %s369 = sshll.u32 %s368, 4
          %s370 = int_to_ptr.hbm [resolvable:$true] %s369
          %s371 = sshll.u32 %s364, 4
          %s372 = int_to_ptr.vmem [resolvable:$true] %s371
          %377 = dma.hbm_to_vmem [thread:$0]  %s370, 256, %s372, %s361, 256, 128, 8
        $region40: #{tpu_custom_call.1} parent=19 // pred_fallthru
          _
      $region20: #{tpu_custom_call.1} parent=5 // pred_fallthru
        _
      %p378 = scmp.le.s32.totalorder 1, %s31
      %p379 = scmp.lt.s32.totalorder %s31, 21
      %p380 = pnand %p378, %p379
      %p381 = pneg %p380
      // Predicated region
      $region41: #{tpu_custom_call.1} parent=5 // pred_check
        _
      $region42: #{tpu_custom_call.1} parent=5 // pred_check_branch
        %383 = sbr.rel (%p380) target = $region44
      $region43: #{tpu_custom_call.1} parent=5 // pred_region
        %s384 = ssub.s32 %s31, 1
        %s385 = sand.u32 %s36, 1
        %s386 = scalar_lea.sflag [#allocation7], %s385
        %s387 = sand.u32 %s56, 1
        %s388 = smul.addr %s387, 16
        %s389 = scalar_lea.vmem [#allocation6], %s388
        // Predicated region
        $region45: #{tpu_custom_call.1} parent=43 // pred_check
          %p390 = pneg %p69
        $region46: #{tpu_custom_call.1} parent=43 // pred_check_branch
          %392 = sbr.rel (%p390) target = $region48
        $region47: #{tpu_custom_call.1} parent=43 // pred_region
          %394 = dma.done %s386, 256
        $region48: #{tpu_custom_call.1} parent=43 // pred_fallthru
          _
        %s395 = sand.u32 %s36, 1
        %s396 = scalar_lea.sflag [#allocation10], %s395
        %s397 = sand.u32 %s82, 1
        %s398 = smul.addr %s397, 2
        %s399 = scalar_lea.vmem [#allocation9], %s398
        // Predicated region
        $region49: #{tpu_custom_call.1} parent=43 // pred_check
          %p400 = pneg %p95
        $region50: #{tpu_custom_call.1} parent=43 // pred_check_branch
          %402 = sbr.rel (%p400) target = $region52
        $region51: #{tpu_custom_call.1} parent=43 // pred_region
          %404 = dma.done %s396, 32
        $region52: #{tpu_custom_call.1} parent=43 // pred_fallthru
          _
        %s405 = sand.u32 %s36, 1
        %s406 = scalar_lea.sflag [#allocation10], %s405
        %s407 = sand.u32 %s108, 1
        %s408 = smul.addr %s407, 16
        %s409 = scalar_lea.vmem [#allocation11], %s408
        // Predicated region
        $region53: #{tpu_custom_call.1} parent=43 // pred_check
          %p410 = pneg %p121
        $region54: #{tpu_custom_call.1} parent=43 // pred_check_branch
          %412 = sbr.rel (%p410) target = $region56
        $region55: #{tpu_custom_call.1} parent=43 // pred_region
          %414 = dma.done %s406, 256
        $region56: #{tpu_custom_call.1} parent=43 // pred_fallthru
          _
        // Predicated region
        $region57: #{tpu_custom_call.1} parent=43 // pred_check
          %p415 = pneg %p142
        $region58: #{tpu_custom_call.1} parent=43 // pred_check_branch
          %417 = sbr.rel (%p415) target = $region60
        $region59: #{tpu_custom_call.1} parent=43 // pred_region
          %419 = dma.done [#allocation13], 256
        $region60: #{tpu_custom_call.1} parent=43 // pred_fallthru
          _
        %s420 = sand.u32 %s36, 1
        %s421 = scalar_lea.sflag [#allocation7], %s420
        %s422 = sand.u32 %s155, 1
        %s423 = smul.addr %s422, 576
        %s424 = scalar_lea.vmem [#allocation14], %s423
        // Predicated region
        $region61: #{tpu_custom_call.1} parent=43 // pred_check
          %p425 = pneg %p168
        $region62: #{tpu_custom_call.1} parent=43 // pred_check_branch
          %427 = sbr.rel (%p425) target = $region64
        $region63: #{tpu_custom_call.1} parent=43 // pred_region
          %429 = dma.done %s421, 9216
        $region64: #{tpu_custom_call.1} parent=43 // pred_fallthru
          _
        %s430 = sand.u32 %s36, 1
        %s431 = scalar_lea.sflag [#allocation10], %s430
        %s432 = sand.u32 %s181, 1
        %s433 = smul.addr %s432, 16
        %s434 = scalar_lea.vmem [#allocation15], %s433
        // Predicated region
        $region65: #{tpu_custom_call.1} parent=43 // pred_check
          %p435 = pneg %p194
        $region66: #{tpu_custom_call.1} parent=43 // pred_check_branch
          %437 = sbr.rel (%p435) target = $region68
        $region67: #{tpu_custom_call.1} parent=43 // pred_region
          %439 = dma.done %s431, 256
        $region68: #{tpu_custom_call.1} parent=43 // pred_fallthru
          _
        %s440 = sand.u32 %s36, 1
        %s441 = scalar_lea.sflag [#allocation7], %s440
        %s442 = sand.u32 %s56, 1
        %s443 = smul.addr %s442, 16
        %s444 = scalar_lea.vmem [#allocation6], %s443
        %p445 = pneg %p69
        %p446 = pneg %p66
        %s447 = sand.u32 %s36, 1
        %s448 = scalar_lea.sflag [#allocation10], %s447
        %s449 = sand.u32 %s82, 1
        %s450 = smul.addr %s449, 2
        %s451 = scalar_lea.vmem [#allocation9], %s450
        %p452 = pneg %p95
        %p453 = pneg %p92
        %s454 = sand.u32 %s36, 1
        %s455 = scalar_lea.sflag [#allocation10], %s454
        %s456 = sand.u32 %s108, 1
        %s457 = smul.addr %s456, 16
        %s458 = scalar_lea.vmem [#allocation11], %s457
        %p459 = pneg %p121
        %p460 = pneg %p118
        %p461 = pneg %p142
        %p462 = pneg %p139
        %s463 = sand.u32 %s36, 1
        %s464 = scalar_lea.sflag [#allocation7], %s463
        %s465 = sand.u32 %s155, 1
        %s466 = smul.addr %s465, 576
        %s467 = scalar_lea.vmem [#allocation14], %s466
        %p468 = pneg %p168
        %p469 = pneg %p165
        %s470 = sand.u32 %s36, 1
        %s471 = scalar_lea.sflag [#allocation10], %s470
        %s472 = sand.u32 %s181, 1
        %s473 = smul.addr %s472, 16
        %s474 = scalar_lea.vmem [#allocation15], %s473
        %p475 = pneg %p194
        %p476 = pneg %p191
        %p477 = pneg %p220
        %p478 = pneg %p217
        %s479 = sand.u32 %s207, 1
        %s480 = sand.u32 %s207, 1
        %s481 = smul.addr %s480, 32
        %s482 = scalar_lea.vmem [#allocation16], %s481
        %p483 = pneg %p241
        %p484 = pneg %p238
        %s485 = smul.u32 144, %s41
        %s486 = sld [smem:[#allocation5 + %s41]]
        %p487 = scmp.eq.s32.totalorder %s40, 9
        %p488 = scmp.eq.s32.totalorder %s40, 0
        %p489 = scmp.eq.s32.totalorder %s41, 0
        %p490 = pnand %p488, %p489
        %p491 = pneg %p490
        // Predicated region
        $region69: #{tpu_custom_call.1} parent=43 // pred_check
          _
        $region70: #{tpu_custom_call.1} parent=43 // pred_check_branch
          %493 = sbr.rel (%p490) target = $region72
        $region71: #{tpu_custom_call.1} parent=43 // pred_region
          %v494 = vld [vmem:[#allocation12] sm:$0xff]
          %v495 = vld [vmem:[#allocation12 + $0x8] sm:$0xff]
          %496 = vst [vmem:[#allocation3] sm:$0xff] %v494
          %497 = vst [vmem:[#allocation3 + $0x8] sm:$0xff] %v495
        $region72: #{tpu_custom_call.1} parent=43 // pred_fallthru
          _
        // Predicated region
        $region73: #{tpu_custom_call.1} parent=43 // pred_check
          %p498 = pneg %p489
        $region74: #{tpu_custom_call.1} parent=43 // pred_check_branch
          %500 = sbr.rel (%p498) target = $region76
        $region75: #{tpu_custom_call.1} parent=43 // pred_region
          %501 = vst [vmem:[#allocation2] sm:$0xff] 0.0
          %502 = vst [vmem:[#allocation2 + $0x8] sm:$0xff] 0.0
        $region76: #{tpu_custom_call.1} parent=43 // pred_fallthru
          _
        %v503 = vld [vmem:[%s424] sm:$0xf]
        %v504 = vld [vmem:[%s424 + $0x4] sm:$0xf]
        %v505 = vld [vmem:[%s424 + $0x8] sm:$0xf]
        %v506 = vld [vmem:[%s424 + $0xc] sm:$0xf]
        %v507 = vld [vmem:[%s424 + $0x10] sm:$0xf]
        %v508 = vld [vmem:[%s424 + $0x14] sm:$0xf]
        %v509 = vld [vmem:[%s424 + $0x18] sm:$0xf]
        %v510 = vld [vmem:[%s424 + $0x1c] sm:$0xf]
        %v511 = vld [vmem:[%s424 + $0x20] sm:$0xf]
        %v512 = vld [vmem:[%s424 + $0x24] sm:$0xf]
        %v513 = vld [vmem:[%s424 + $0x28] sm:$0xf]
        %v514 = vld [vmem:[%s424 + $0x2c] sm:$0xf]
        %v515 = vld [vmem:[%s424 + $0x30] sm:$0xf]
        %v516 = vld [vmem:[%s424 + $0x34] sm:$0xf]
        %v517 = vld [vmem:[%s424 + $0x38] sm:$0xf]
        %v518 = vld [vmem:[%s424 + $0x3c] sm:$0xf]
        %v519 = vld [vmem:[%s424 + $0x40] sm:$0xf]
        %v520 = vld [vmem:[%s424 + $0x44] sm:$0xf]
        %v521 = vld [vmem:[%s424 + $0x48] sm:$0xf]
        %v522 = vld [vmem:[%s424 + $0x4c] sm:$0xf]
        %v523 = vld [vmem:[%s424 + $0x50] sm:$0xf]
        %v524 = vld [vmem:[%s424 + $0x54] sm:$0xf]
        %v525 = vld [vmem:[%s424 + $0x58] sm:$0xf]
        %v526 = vld [vmem:[%s424 + $0x5c] sm:$0xf]
        %v527 = vld [vmem:[%s424 + $0x60] sm:$0xf]
        %v528 = vld [vmem:[%s424 + $0x64] sm:$0xf]
        %v529 = vld [vmem:[%s424 + $0x68] sm:$0xf]
        %v530 = vld [vmem:[%s424 + $0x6c] sm:$0xf]
        %v531 = vld [vmem:[%s424 + $0x70] sm:$0xf]
        %v532 = vld [vmem:[%s424 + $0x74] sm:$0xf]
        %v533 = vld [vmem:[%s424 + $0x78] sm:$0xf]
        %v534 = vld [vmem:[%s424 + $0x7c] sm:$0xf]
        %v535 = vld [vmem:[%s424 + $0x80] sm:$0xf]
        %v536 = vld [vmem:[%s424 + $0x84] sm:$0xf]
        %v537 = vld [vmem:[%s424 + $0x88] sm:$0xf]
        %v538 = vld [vmem:[%s424 + $0x8c] sm:$0xf]
        %v539 = vld [vmem:[%s424 + $0x90] sm:$0xf]
        %v540 = vld [vmem:[%s424 + $0x94] sm:$0xf]
        %v541 = vld [vmem:[%s424 + $0x98] sm:$0xf]
        %v542 = vld [vmem:[%s424 + $0x9c] sm:$0xf]
        %v543 = vld [vmem:[%s424 + $0xa0] sm:$0xf]
        %v544 = vld [vmem:[%s424 + $0xa4] sm:$0xf]
        %v545 = vld [vmem:[%s424 + $0xa8] sm:$0xf]
        %v546 = vld [vmem:[%s424 + $0xac] sm:$0xf]
        %v547 = vld [vmem:[%s424 + $0xb0] sm:$0xf]
        %v548 = vld [vmem:[%s424 + $0xb4] sm:$0xf]
        %v549 = vld [vmem:[%s424 + $0xb8] sm:$0xf]
        %v550 = vld [vmem:[%s424 + $0xbc] sm:$0xf]
        %v551 = vld [vmem:[%s424 + $0xc0] sm:$0xf]
        %v552 = vld [vmem:[%s424 + $0xc4] sm:$0xf]
        %v553 = vld [vmem:[%s424 + $0xc8] sm:$0xf]
        %v554 = vld [vmem:[%s424 + $0xcc] sm:$0xf]
        %v555 = vld [vmem:[%s424 + $0xd0] sm:$0xf]
        %v556 = vld [vmem:[%s424 + $0xd4] sm:$0xf]
        %v557 = vld [vmem:[%s424 + $0xd8] sm:$0xf]
        %v558 = vld [vmem:[%s424 + $0xdc] sm:$0xf]
        %v559 = vld [vmem:[%s424 + $0xe0] sm:$0xf]
        %v560 = vld [vmem:[%s424 + $0xe4] sm:$0xf]
        %v561 = vld [vmem:[%s424 + $0xe8] sm:$0xf]
        %v562 = vld [vmem:[%s424 + $0xec] sm:$0xf]
        %v563 = vld [vmem:[%s424 + $0xf0] sm:$0xf]
        %v564 = vld [vmem:[%s424 + $0xf4] sm:$0xf]
        %v565 = vld [vmem:[%s424 + $0xf8] sm:$0xf]
        %v566 = vld [vmem:[%s424 + $0xfc] sm:$0xf]
        %v567 = vld [vmem:[%s424 + $0x100] sm:$0xf]
        %v568 = vld [vmem:[%s424 + $0x104] sm:$0xf]
        %v569 = vld [vmem:[%s424 + $0x108] sm:$0xf]
        %v570 = vld [vmem:[%s424 + $0x10c] sm:$0xf]
        %v571 = vld [vmem:[%s424 + $0x110] sm:$0xf]
        %v572 = vld [vmem:[%s424 + $0x114] sm:$0xf]
        %v573 = vld [vmem:[%s424 + $0x118] sm:$0xf]
        %v574 = vld [vmem:[%s424 + $0x11c] sm:$0xf]
        %v575 = vld [vmem:[%s424 + $0x120] sm:$0xf]
        %v576 = vld [vmem:[%s424 + $0x124] sm:$0xf]
        %v577 = vld [vmem:[%s424 + $0x128] sm:$0xf]
        %v578 = vld [vmem:[%s424 + $0x12c] sm:$0xf]
        %v579 = vld [vmem:[%s424 + $0x130] sm:$0xf]
        %v580 = vld [vmem:[%s424 + $0x134] sm:$0xf]
        %v581 = vld [vmem:[%s424 + $0x138] sm:$0xf]
        %v582 = vld [vmem:[%s424 + $0x13c] sm:$0xf]
        %v583 = vld [vmem:[%s424 + $0x140] sm:$0xf]
        %v584 = vld [vmem:[%s424 + $0x144] sm:$0xf]
        %v585 = vld [vmem:[%s424 + $0x148] sm:$0xf]
        %v586 = vld [vmem:[%s424 + $0x14c] sm:$0xf]
        %v587 = vld [vmem:[%s424 + $0x150] sm:$0xf]
        %v588 = vld [vmem:[%s424 + $0x154] sm:$0xf]
        %v589 = vld [vmem:[%s424 + $0x158] sm:$0xf]
        %v590 = vld [vmem:[%s424 + $0x15c] sm:$0xf]
        %v591 = vld [vmem:[%s424 + $0x160] sm:$0xf]
        %v592 = vld [vmem:[%s424 + $0x164] sm:$0xf]
        %v593 = vld [vmem:[%s424 + $0x168] sm:$0xf]
        %v594 = vld [vmem:[%s424 + $0x16c] sm:$0xf]
        %v595 = vld [vmem:[%s424 + $0x170] sm:$0xf]
        %v596 = vld [vmem:[%s424 + $0x174] sm:$0xf]
        %v597 = vld [vmem:[%s424 + $0x178] sm:$0xf]
        %v598 = vld [vmem:[%s424 + $0x17c] sm:$0xf]
        %v599 = vld [vmem:[%s424 + $0x180] sm:$0xf]
        %v600 = vld [vmem:[%s424 + $0x184] sm:$0xf]
        %v601 = vld [vmem:[%s424 + $0x188] sm:$0xf]
        %v602 = vld [vmem:[%s424 + $0x18c] sm:$0xf]
        %v603 = vld [vmem:[%s424 + $0x190] sm:$0xf]
        %v604 = vld [vmem:[%s424 + $0x194] sm:$0xf]
        %v605 = vld [vmem:[%s424 + $0x198] sm:$0xf]
        %v606 = vld [vmem:[%s424 + $0x19c] sm:$0xf]
        %v607 = vld [vmem:[%s424 + $0x1a0] sm:$0xf]
        %v608 = vld [vmem:[%s424 + $0x1a4] sm:$0xf]
        %v609 = vld [vmem:[%s424 + $0x1a8] sm:$0xf]
        %v610 = vld [vmem:[%s424 + $0x1ac] sm:$0xf]
        %v611 = vld [vmem:[%s424 + $0x1b0] sm:$0xf]
        %v612 = vld [vmem:[%s424 + $0x1b4] sm:$0xf]
        %v613 = vld [vmem:[%s424 + $0x1b8] sm:$0xf]
        %v614 = vld [vmem:[%s424 + $0x1bc] sm:$0xf]
        %v615 = vld [vmem:[%s424 + $0x1c0] sm:$0xf]
        %v616 = vld [vmem:[%s424 + $0x1c4] sm:$0xf]
        %v617 = vld [vmem:[%s424 + $0x1c8] sm:$0xf]
        %v618 = vld [vmem:[%s424 + $0x1cc] sm:$0xf]
        %v619 = vld [vmem:[%s424 + $0x1d0] sm:$0xf]
        %v620 = vld [vmem:[%s424 + $0x1d4] sm:$0xf]
        %v621 = vld [vmem:[%s424 + $0x1d8] sm:$0xf]
        %v622 = vld [vmem:[%s424 + $0x1dc] sm:$0xf]
        %v623 = vld [vmem:[%s424 + $0x1e0] sm:$0xf]
        %v624 = vld [vmem:[%s424 + $0x1e4] sm:$0xf]
        %v625 = vld [vmem:[%s424 + $0x1e8] sm:$0xf]
        %v626 = vld [vmem:[%s424 + $0x1ec] sm:$0xf]
        %v627 = vld [vmem:[%s424 + $0x1f0] sm:$0xf]
        %v628 = vld [vmem:[%s424 + $0x1f4] sm:$0xf]
        %v629 = vld [vmem:[%s424 + $0x1f8] sm:$0xf]
        %v630 = vld [vmem:[%s424 + $0x1fc] sm:$0xf]
        %v631 = vld [vmem:[%s424 + $0x200] sm:$0xf]
        %v632 = vld [vmem:[%s424 + $0x204] sm:$0xf]
        %v633 = vld [vmem:[%s424 + $0x208] sm:$0xf]
        %v634 = vld [vmem:[%s424 + $0x20c] sm:$0xf]
        %v635 = vld [vmem:[%s424 + $0x210] sm:$0xf]
        %v636 = vld [vmem:[%s424 + $0x214] sm:$0xf]
        %v637 = vld [vmem:[%s424 + $0x218] sm:$0xf]
        %v638 = vld [vmem:[%s424 + $0x21c] sm:$0xf]
        %v639 = vld [vmem:[%s424 + $0x220] sm:$0xf]
        %v640 = vld [vmem:[%s424 + $0x224] sm:$0xf]
        %v641 = vld [vmem:[%s424 + $0x228] sm:$0xf]
        %v642 = vld [vmem:[%s424 + $0x22c] sm:$0xf]
        %v643 = vld [vmem:[%s424 + $0x230] sm:$0xf]
        %v644 = vld [vmem:[%s424 + $0x234] sm:$0xf]
        %v645 = vld [vmem:[%s424 + $0x238] sm:$0xf]
        %v646 = vld [vmem:[%s424 + $0x23c] sm:$0xf]
        %s647 = smul.u32 %s486, 16
        %s648 = scalar_lea.vmem [#allocation3], %s647
        %v649 = vld [vmem:[%s648] sm:$0xff]
        %v650 = vld [vmem:[%s648 + $0x8] sm:$0xff]
        %v651 = vpack.c.bf16 %v650, %v649
        %v796 = vunpack.c.l.b16 %v503
        %v797 = vunpack.c.l.b16 %v504
        %v798 = vunpack.c.l.b16 %v505
        %v799 = vunpack.c.l.b16 %v506
        %v800 = vunpack.c.l.b16 %v507
        %v801 = vunpack.c.l.b16 %v508
        %v802 = vunpack.c.l.b16 %v509
        %v803 = vunpack.c.l.b16 %v510
        %v804 = vunpack.c.l.b16 %v511
        %v805 = vunpack.c.l.b16 %v512
        %v806 = vunpack.c.l.b16 %v513
        %v807 = vunpack.c.l.b16 %v514
        %v808 = vunpack.c.l.b16 %v515
        %v809 = vunpack.c.l.b16 %v516
        %v810 = vunpack.c.l.b16 %v517
        %v811 = vunpack.c.l.b16 %v518
        %v812 = vunpack.c.l.b16 %v519
        %v813 = vunpack.c.l.b16 %v520
        %v814 = vunpack.c.l.b16 %v521
        %v815 = vunpack.c.l.b16 %v522
        %v816 = vunpack.c.l.b16 %v523
        %v817 = vunpack.c.l.b16 %v524
        %v818 = vunpack.c.l.b16 %v525
        %v819 = vunpack.c.l.b16 %v526
        %v820 = vunpack.c.l.b16 %v527
        %v821 = vunpack.c.l.b16 %v528
        %v822 = vunpack.c.l.b16 %v529
        %v823 = vunpack.c.l.b16 %v530
        %v824 = vunpack.c.l.b16 %v531
        %v825 = vunpack.c.l.b16 %v532
        %v826 = vunpack.c.l.b16 %v533
        %v827 = vunpack.c.l.b16 %v534
        %v828 = vunpack.c.l.b16 %v535
        %v829 = vunpack.c.l.b16 %v536
        %v830 = vunpack.c.l.b16 %v537
        %v831 = vunpack.c.l.b16 %v538
        %v832 = vunpack.c.l.b16 %v539
        %v833 = vunpack.c.l.b16 %v540
        %v834 = vunpack.c.l.b16 %v541
        %v835 = vunpack.c.l.b16 %v542
        %v836 = vunpack.c.l.b16 %v543
        %v837 = vunpack.c.l.b16 %v544
        %v838 = vunpack.c.l.b16 %v545
        %v839 = vunpack.c.l.b16 %v546
        %v840 = vunpack.c.l.b16 %v547
        %v841 = vunpack.c.l.b16 %v548
        %v842 = vunpack.c.l.b16 %v549
        %v843 = vunpack.c.l.b16 %v550
        %v844 = vunpack.c.l.b16 %v551
        %v845 = vunpack.c.l.b16 %v552
        %v846 = vunpack.c.l.b16 %v553
        %v847 = vunpack.c.l.b16 %v554
        %v848 = vunpack.c.l.b16 %v555
        %v849 = vunpack.c.l.b16 %v556
        %v850 = vunpack.c.l.b16 %v557
        %v851 = vunpack.c.l.b16 %v558
        %v852 = vunpack.c.l.b16 %v559
        %v853 = vunpack.c.l.b16 %v560
        %v854 = vunpack.c.l.b16 %v561
        %v855 = vunpack.c.l.b16 %v562
        %v856 = vunpack.c.l.b16 %v563
        %v857 = vunpack.c.l.b16 %v564
        %v858 = vunpack.c.l.b16 %v565
        %v859 = vunpack.c.l.b16 %v566
        %v860 = vunpack.c.l.b16 %v567
        %v861 = vunpack.c.l.b16 %v568
        %v862 = vunpack.c.l.b16 %v569
        %v863 = vunpack.c.l.b16 %v570
        %v864 = vunpack.c.l.b16 %v571
        %v865 = vunpack.c.l.b16 %v572
        %v866 = vunpack.c.l.b16 %v573
        %v867 = vunpack.c.l.b16 %v574
        %v868 = vunpack.c.l.b16 %v575
        %v869 = vunpack.c.l.b16 %v576
        %v870 = vunpack.c.l.b16 %v577
        %v871 = vunpack.c.l.b16 %v578
        %v872 = vunpack.c.l.b16 %v579
        %v873 = vunpack.c.l.b16 %v580
        %v874 = vunpack.c.l.b16 %v581
        %v875 = vunpack.c.l.b16 %v582
        %v876 = vunpack.c.l.b16 %v583
        %v877 = vunpack.c.l.b16 %v584
        %v878 = vunpack.c.l.b16 %v585
        %v879 = vunpack.c.l.b16 %v586
        %v880 = vunpack.c.l.b16 %v587
        %v881 = vunpack.c.l.b16 %v588
        %v882 = vunpack.c.l.b16 %v589
        %v883 = vunpack.c.l.b16 %v590
        %v884 = vunpack.c.l.b16 %v591
        %v885 = vunpack.c.l.b16 %v592
        %v886 = vunpack.c.l.b16 %v593
        %v887 = vunpack.c.l.b16 %v594
        %v888 = vunpack.c.l.b16 %v595
        %v889 = vunpack.c.l.b16 %v596
        %v890 = vunpack.c.l.b16 %v597
        %v891 = vunpack.c.l.b16 %v598
        %v892 = vunpack.c.l.b16 %v599
        %v893 = vunpack.c.l.b16 %v600
        %v894 = vunpack.c.l.b16 %v601
        %v895 = vunpack.c.l.b16 %v602
        %v896 = vunpack.c.l.b16 %v603
        %v897 = vunpack.c.l.b16 %v604
        %v898 = vunpack.c.l.b16 %v605
        %v899 = vunpack.c.l.b16 %v606
        %v900 = vunpack.c.l.b16 %v607
        %v901 = vunpack.c.l.b16 %v608
        %v902 = vunpack.c.l.b16 %v609
        %v903 = vunpack.c.l.b16 %v610
        %v904 = vunpack.c.l.b16 %v611
        %v905 = vunpack.c.l.b16 %v612
        %v906 = vunpack.c.l.b16 %v613
        %v907 = vunpack.c.l.b16 %v614
        %v908 = vunpack.c.l.b16 %v615
        %v909 = vunpack.c.l.b16 %v616
        %v910 = vunpack.c.l.b16 %v617
        %v911 = vunpack.c.l.b16 %v618
        %v912 = vunpack.c.l.b16 %v619
        %v913 = vunpack.c.l.b16 %v620
        %v914 = vunpack.c.l.b16 %v621
        %v915 = vunpack.c.l.b16 %v622
        %v916 = vunpack.c.l.b16 %v623
        %v917 = vunpack.c.l.b16 %v624
        %v918 = vunpack.c.l.b16 %v625
        %v919 = vunpack.c.l.b16 %v626
        %v920 = vunpack.c.l.b16 %v627
        %v921 = vunpack.c.l.b16 %v628
        %v922 = vunpack.c.l.b16 %v629
        %v923 = vunpack.c.l.b16 %v630
        %v924 = vunpack.c.l.b16 %v631
        %v925 = vunpack.c.l.b16 %v632
        %v926 = vunpack.c.l.b16 %v633
        %v927 = vunpack.c.l.b16 %v634
        %v928 = vunpack.c.l.b16 %v635
        %v929 = vunpack.c.l.b16 %v636
        %v930 = vunpack.c.l.b16 %v637
        %v931 = vunpack.c.l.b16 %v638
        %v932 = vunpack.c.l.b16 %v639
        %v933 = vunpack.c.l.b16 %v640
        %v934 = vunpack.c.l.b16 %v641
        %v935 = vunpack.c.l.b16 %v642
        %v936 = vunpack.c.l.b16 %v643
        %v937 = vunpack.c.l.b16 %v644
        %v938 = vunpack.c.l.b16 %v645
        %v939 = vunpack.c.l.b16 %v646
        %v940 = vpack.c.b16 %v797, %v796
        %v941 = vpack.c.b16 %v799, %v798
        %v942 = vpack.c.b16 %v801, %v800
        %v943 = vpack.c.b16 %v803, %v802
        %v944 = vpack.c.b16 %v805, %v804
        %v945 = vpack.c.b16 %v807, %v806
        %v946 = vpack.c.b16 %v809, %v808
        %v947 = vpack.c.b16 %v811, %v810
        %v948 = vpack.c.b16 %v813, %v812
        %v949 = vpack.c.b16 %v815, %v814
        %v950 = vpack.c.b16 %v817, %v816
        %v951 = vpack.c.b16 %v819, %v818
        %v952 = vpack.c.b16 %v821, %v820
        %v953 = vpack.c.b16 %v823, %v822
        %v954 = vpack.c.b16 %v825, %v824
        %v955 = vpack.c.b16 %v827, %v826
        %v956 = vpack.c.b16 %v829, %v828
        %v957 = vpack.c.b16 %v831, %v830
        %v958 = vpack.c.b16 %v833, %v832
        %v959 = vpack.c.b16 %v835, %v834
        %v960 = vpack.c.b16 %v837, %v836
        %v961 = vpack.c.b16 %v839, %v838
        %v962 = vpack.c.b16 %v841, %v840
        %v963 = vpack.c.b16 %v843, %v842
        %v964 = vpack.c.b16 %v845, %v844
        %v965 = vpack.c.b16 %v847, %v846
        %v966 = vpack.c.b16 %v849, %v848
        %v967 = vpack.c.b16 %v851, %v850
        %v968 = vpack.c.b16 %v853, %v852
        %v969 = vpack.c.b16 %v855, %v854
        %v970 = vpack.c.b16 %v857, %v856
        %v971 = vpack.c.b16 %v859, %v858
        %v972 = vpack.c.b16 %v861, %v860
        %v973 = vpack.c.b16 %v863, %v862
        %v974 = vpack.c.b16 %v865, %v864
        %v975 = vpack.c.b16 %v867, %v866
        %v976 = vpack.c.b16 %v869, %v868
        %v977 = vpack.c.b16 %v871, %v870
        %v978 = vpack.c.b16 %v873, %v872
        %v979 = vpack.c.b16 %v875, %v874
        %v980 = vpack.c.b16 %v877, %v876
        %v981 = vpack.c.b16 %v879, %v878
        %v982 = vpack.c.b16 %v881, %v880
        %v983 = vpack.c.b16 %v883, %v882
        %v984 = vpack.c.b16 %v885, %v884
        %v985 = vpack.c.b16 %v887, %v886
        %v986 = vpack.c.b16 %v889, %v888
        %v987 = vpack.c.b16 %v891, %v890
        %v988 = vpack.c.b16 %v893, %v892
        %v989 = vpack.c.b16 %v895, %v894
        %v990 = vpack.c.b16 %v897, %v896
        %v991 = vpack.c.b16 %v899, %v898
        %v992 = vpack.c.b16 %v901, %v900
        %v993 = vpack.c.b16 %v903, %v902
        %v994 = vpack.c.b16 %v905, %v904
        %v995 = vpack.c.b16 %v907, %v906
        %v996 = vpack.c.b16 %v909, %v908
        %v997 = vpack.c.b16 %v911, %v910
        %v998 = vpack.c.b16 %v913, %v912
        %v999 = vpack.c.b16 %v915, %v914
        %v1000 = vpack.c.b16 %v917, %v916
        %v1001 = vpack.c.b16 %v919, %v918
        %v1002 = vpack.c.b16 %v921, %v920
        %v1003 = vpack.c.b16 %v923, %v922
        %v1004 = vpack.c.b16 %v925, %v924
        %v1005 = vpack.c.b16 %v927, %v926
        %v1006 = vpack.c.b16 %v929, %v928
        %v1007 = vpack.c.b16 %v931, %v930
        %v1008 = vpack.c.b16 %v933, %v932
        %v1009 = vpack.c.b16 %v935, %v934
        %v1010 = vpack.c.b16 %v937, %v936
        %v1011 = vpack.c.b16 %v939, %v938
        %1084 = vmatpush.bf16.xpose.msra.mxu0 %v947
        %1085 = vmatpush.bf16.xpose.msra.mxu0 %v946
        %1086 = vmatpush.bf16.xpose.msra.mxu0 %v945
        %1087 = vmatpush.bf16.xpose.msra.mxu0 %v944
        %1088 = vmatpush.bf16.xpose.msra.mxu0 %v943
        %1089 = vmatpush.bf16.xpose.msra.mxu0 %v942
        %1090 = vmatpush.bf16.xpose.msra.mxu0 %v941
        %1091 = vmatpush.bf16.xpose.msra.mxu0 %v940
        %1092 = vmatmul.bf16.gmra.mxu0 %v651
        %v1093 = vpop.f32.mrf.mxu0
        %v1094 = vadd.f32 0.0, %v1093
        %v1095 = vpop.f32.mrf.mxu0
        %v1096 = vadd.f32 0.0, %v1095
        %1097 = vdwg.mxu0
        %1098 = vmatpush.bf16.xpose.msra.mxu0 %v955
        %1099 = vmatpush.bf16.xpose.msra.mxu0 %v954
        %1100 = vmatpush.bf16.xpose.msra.mxu0 %v953
        %1101 = vmatpush.bf16.xpose.msra.mxu0 %v952
        %1102 = vmatpush.bf16.xpose.msra.mxu0 %v951
        %1103 = vmatpush.bf16.xpose.msra.mxu0 %v950
        %1104 = vmatpush.bf16.xpose.msra.mxu0 %v949
        %1105 = vmatpush.bf16.xpose.msra.mxu0 %v948
        %1106 = vmatmul.bf16.gmra.mxu0 %v651
        %v1107 = vpop.f32.mrf.mxu0
        %v1108 = vadd.f32 0.0, %v1107
        %v1109 = vpop.f32.mrf.mxu0
        %v1110 = vadd.f32 0.0, %v1109
        %1111 = vdwg.mxu0
        %1112 = vmatpush.bf16.xpose.msra.mxu0 %v963
        %1113 = vmatpush.bf16.xpose.msra.mxu0 %v962
        %1114 = vmatpush.bf16.xpose.msra.mxu0 %v961
        %1115 = vmatpush.bf16.xpose.msra.mxu0 %v960
        %1116 = vmatpush.bf16.xpose.msra.mxu0 %v959
        %1117 = vmatpush.bf16.xpose.msra.mxu0 %v958
        %1118 = vmatpush.bf16.xpose.msra.mxu0 %v957
        %1119 = vmatpush.bf16.xpose.msra.mxu0 %v956
        %1120 = vmatmul.bf16.gmra.mxu0 %v651
        %v1121 = vpop.f32.mrf.mxu0
        %v1122 = vadd.f32 0.0, %v1121
        %v1123 = vpop.f32.mrf.mxu0
        %v1124 = vadd.f32 0.0, %v1123
        %1125 = vdwg.mxu0
        %1126 = vmatpush.bf16.xpose.msra.mxu0 %v971
        %1127 = vmatpush.bf16.xpose.msra.mxu0 %v970
        %1128 = vmatpush.bf16.xpose.msra.mxu0 %v969
        %1129 = vmatpush.bf16.xpose.msra.mxu0 %v968
        %1130 = vmatpush.bf16.xpose.msra.mxu0 %v967
        %1131 = vmatpush.bf16.xpose.msra.mxu0 %v966
        %1132 = vmatpush.bf16.xpose.msra.mxu0 %v965
        %1133 = vmatpush.bf16.xpose.msra.mxu0 %v964
        %1134 = vmatmul.bf16.gmra.mxu0 %v651
        %v1135 = vpop.f32.mrf.mxu0
        %v1136 = vadd.f32 0.0, %v1135
        %v1137 = vpop.f32.mrf.mxu0
        %v1138 = vadd.f32 0.0, %v1137
        %1139 = vdwg.mxu0
        %1140 = vmatpush.bf16.xpose.msra.mxu0 %v979
        %1141 = vmatpush.bf16.xpose.msra.mxu0 %v978
        %1142 = vmatpush.bf16.xpose.msra.mxu0 %v977
        %1143 = vmatpush.bf16.xpose.msra.mxu0 %v976
        %1144 = vmatpush.bf16.xpose.msra.mxu0 %v975
        %1145 = vmatpush.bf16.xpose.msra.mxu0 %v974
        %1146 = vmatpush.bf16.xpose.msra.mxu0 %v973
        %1147 = vmatpush.bf16.xpose.msra.mxu0 %v972
        %1148 = vmatmul.bf16.gmra.mxu0 %v651
        %v1149 = vpop.f32.mrf.mxu0
        %v1150 = vadd.f32 0.0, %v1149
        %v1151 = vpop.f32.mrf.mxu0
        %v1152 = vadd.f32 0.0, %v1151
        %1153 = vdwg.mxu0
        %1154 = vmatpush.bf16.xpose.msra.mxu0 %v987
        %1155 = vmatpush.bf16.xpose.msra.mxu0 %v986
        %1156 = vmatpush.bf16.xpose.msra.mxu0 %v985
        %1157 = vmatpush.bf16.xpose.msra.mxu0 %v984
        %1158 = vmatpush.bf16.xpose.msra.mxu0 %v983
        %1159 = vmatpush.bf16.xpose.msra.mxu0 %v982
        %1160 = vmatpush.bf16.xpose.msra.mxu0 %v981
        %1161 = vmatpush.bf16.xpose.msra.mxu0 %v980
        %1162 = vmatmul.bf16.gmra.mxu0 %v651
        %v1163 = vpop.f32.mrf.mxu0
        %v1164 = vadd.f32 0.0, %v1163
        %v1165 = vpop.f32.mrf.mxu0
        %v1166 = vadd.f32 0.0, %v1165
        %1167 = vdwg.mxu0
        %1168 = vmatpush.bf16.xpose.msra.mxu0 %v995
        %1169 = vmatpush.bf16.xpose.msra.mxu0 %v994
        %1170 = vmatpush.bf16.xpose.msra.mxu0 %v993
        %1171 = vmatpush.bf16.xpose.msra.mxu0 %v992
        %1172 = vmatpush.bf16.xpose.msra.mxu0 %v991
        %1173 = vmatpush.bf16.xpose.msra.mxu0 %v990
        %1174 = vmatpush.bf16.xpose.msra.mxu0 %v989
        %1175 = vmatpush.bf16.xpose.msra.mxu0 %v988
        %1176 = vmatmul.bf16.gmra.mxu0 %v651
        %v1177 = vpop.f32.mrf.mxu0
        %v1178 = vadd.f32 0.0, %v1177
        %v1179 = vpop.f32.mrf.mxu0
        %v1180 = vadd.f32 0.0, %v1179
        %1181 = vdwg.mxu0
        %1182 = vmatpush.bf16.xpose.msra.mxu0 %v1003
        %1183 = vmatpush.bf16.xpose.msra.mxu0 %v1002
        %1184 = vmatpush.bf16.xpose.msra.mxu0 %v1001
        %1185 = vmatpush.bf16.xpose.msra.mxu0 %v1000
        %1186 = vmatpush.bf16.xpose.msra.mxu0 %v999
        %1187 = vmatpush.bf16.xpose.msra.mxu0 %v998
        %1188 = vmatpush.bf16.xpose.msra.mxu0 %v997
        %1189 = vmatpush.bf16.xpose.msra.mxu0 %v996
        %1190 = vmatmul.bf16.gmra.mxu0 %v651
        %v1191 = vpop.f32.mrf.mxu0
        %v1192 = vadd.f32 0.0, %v1191
        %v1193 = vpop.f32.mrf.mxu0
        %v1194 = vadd.f32 0.0, %v1193
        %1195 = vdwg.mxu0
        %1196 = vmatpush.bf16.xpose.msra.mxu0 %v1011
        %1197 = vmatpush.bf16.xpose.msra.mxu0 %v1010
        %1198 = vmatpush.bf16.xpose.msra.mxu0 %v1009
        %1199 = vmatpush.bf16.xpose.msra.mxu0 %v1008
        %1200 = vmatpush.bf16.xpose.msra.mxu0 %v1007
        %1201 = vmatpush.bf16.xpose.msra.mxu0 %v1006
        %1202 = vmatpush.bf16.xpose.msra.mxu0 %v1005
        %1203 = vmatpush.bf16.xpose.msra.mxu0 %v1004
        %1204 = vmatmul.bf16.gmra.mxu0 %v651
        %v1205 = vpop.f32.mrf.mxu0
        %v1206 = vadd.f32 0.0, %v1205
        %v1207 = vpop.f32.mrf.mxu0
        %v1208 = vadd.f32 0.0, %v1207
        %1209 = vdwg.mxu0
        %v1210 = vld [vmem:[%s389] sm:$0xff]
        %v1211 = vld [vmem:[%s389 + $0x8] sm:$0xff]
        %v1212 = vld [vmem:[%s434] sm:$0xff]
        %v1213 = vld [vmem:[%s434 + $0x8] sm:$0x1]
        %v1214 = vld [vmem:[%s409] sm:$0xff]
        %v1215 = vld [vmem:[%s409 + $0x8] sm:$0xff]
        %s1216 = scalar_select %p487, 1, 0
        %v1217 = vstv %s1216
        %vm1218 = vcmp.eq.s32.totalorder %v1217, 1
        %v1219 = vsel %vm1218, %v1214, %v1210
        %v1220 = vsel %vm1218, %v1215, %v1211
        %v1221 = vmul.f32 %v1210, %v1094
        %vm1222 = vcmask 1045504
        %v1223 = vsel %vm1222, %v1221, 0.0
        %v1224 = vrot.slane %v1223, 4
        %v1225 = vadd.f32 %v1223, %v1224
        %v1226 = vrot.slane %v1225, 2
        %v1227 = vadd.f32 %v1225, %v1226
        %v1228 = vrot.slane %v1227, 1
        %v1229 = vadd.f32 %v1227, %v1228
        %v1230 = vmul.f32 %v1229, 2.0
        %v1231 = vsub.f32 %v1230, %v1094
        %v1232 = vmul.f32 %v1210, %v1108
        %v1233 = vsel %vm1222, %v1232, 0.0
        %v1234 = vrot.slane %v1233, 4
        %v1235 = vadd.f32 %v1233, %v1234
        %v1236 = vrot.slane %v1235, 2
        %v1237 = vadd.f32 %v1235, %v1236
        %v1238 = vrot.slane %v1237, 1
        %v1239 = vadd.f32 %v1237, %v1238
        %v1240 = vmul.f32 %v1239, 2.0
        %v1241 = vsub.f32 %v1240, %v1108
        %v1242 = vmul.f32 %v1210, %v1122
        %v1243 = vsel %vm1222, %v1242, 0.0
        %v1244 = vrot.slane %v1243, 4
        %v1245 = vadd.f32 %v1243, %v1244
        %v1246 = vrot.slane %v1245, 2
        %v1247 = vadd.f32 %v1245, %v1246
        %v1248 = vrot.slane %v1247, 1
        %v1249 = vadd.f32 %v1247, %v1248
        %v1250 = vmul.f32 %v1249, 2.0
        %v1251 = vsub.f32 %v1250, %v1122
        %v1252 = vmul.f32 %v1210, %v1136
        %v1253 = vsel %vm1222, %v1252, 0.0
        %v1254 = vrot.slane %v1253, 4
        %v1255 = vadd.f32 %v1253, %v1254
        %v1256 = vrot.slane %v1255, 2
        %v1257 = vadd.f32 %v1255, %v1256
        %v1258 = vrot.slane %v1257, 1
        %v1259 = vadd.f32 %v1257, %v1258
        %v1260 = vmul.f32 %v1259, 2.0
        %v1261 = vsub.f32 %v1260, %v1136
        %v1262 = vmul.f32 %v1210, %v1150
        %v1263 = vsel %vm1222, %v1262, 0.0
        %v1264 = vrot.slane %v1263, 4
        %v1265 = vadd.f32 %v1263, %v1264
        %v1266 = vrot.slane %v1265, 2
        %v1267 = vadd.f32 %v1265, %v1266
        %v1268 = vrot.slane %v1267, 1
        %v1269 = vadd.f32 %v1267, %v1268
        %v1270 = vmul.f32 %v1269, 2.0
        %v1271 = vsub.f32 %v1270, %v1150
        %v1272 = vmul.f32 %v1210, %v1164
        %v1273 = vsel %vm1222, %v1272, 0.0
        %v1274 = vrot.slane %v1273, 4
        %v1275 = vadd.f32 %v1273, %v1274
        %v1276 = vrot.slane %v1275, 2
        %v1277 = vadd.f32 %v1275, %v1276
        %v1278 = vrot.slane %v1277, 1
        %v1279 = vadd.f32 %v1277, %v1278
        %v1280 = vmul.f32 %v1279, 2.0
        %v1281 = vsub.f32 %v1280, %v1164
        %v1282 = vmul.f32 %v1210, %v1178
        %v1283 = vsel %vm1222, %v1282, 0.0
        %v1284 = vrot.slane %v1283, 4
        %v1285 = vadd.f32 %v1283, %v1284
        %v1286 = vrot.slane %v1285, 2
        %v1287 = vadd.f32 %v1285, %v1286
        %v1288 = vrot.slane %v1287, 1
        %v1289 = vadd.f32 %v1287, %v1288
        %v1290 = vmul.f32 %v1289, 2.0
        %v1291 = vsub.f32 %v1290, %v1178
        %v1292 = vmul.f32 %v1210, %v1192
        %v1293 = vsel %vm1222, %v1292, 0.0
        %v1294 = vrot.slane %v1293, 4
        %v1295 = vadd.f32 %v1293, %v1294
        %v1296 = vrot.slane %v1295, 2
        %v1297 = vadd.f32 %v1295, %v1296
        %v1298 = vrot.slane %v1297, 1
        %v1299 = vadd.f32 %v1297, %v1298
        %v1300 = vmul.f32 %v1299, 2.0
        %v1301 = vsub.f32 %v1300, %v1192
        %v1302 = vmul.f32 %v1210, %v1206
        %v1303 = vsel %vm1222, %v1302, 0.0
        %v1304 = vrot.slane %v1303, 4
        %v1305 = vadd.f32 %v1303, %v1304
        %v1306 = vrot.slane %v1305, 2
        %v1307 = vadd.f32 %v1305, %v1306
        %v1308 = vrot.slane %v1307, 1
        %v1309 = vadd.f32 %v1307, %v1308
        %v1310 = vmul.f32 %v1309, 2.0
        %v1311 = vsub.f32 %v1310, %v1206
        %v1313 = vrot.slane %v1231, 6
        %v1316 = vrot.slane %v1241, 5
        %v1319 = vrot.slane %v1251, 4
        %v1322 = vrot.slane %v1261, 3
        %v1325 = vrot.slane %v1271, 2
        %v1328 = vrot.slane %v1281, 1
        %v1331 = vrot.slane %v1301, 7
        %v1334 = vrot.slane %v1311, 6
        %vm1336 = vcmask 1040384
        %v1337 = vsel %vm1336, %v1313, %v1316
        %vm1338 = vcmask 1041408
        %v1339 = vsel %vm1338, %v1337, %v1319
        %vm1340 = vcmask 1042432
        %v1341 = vsel %vm1340, %v1339, %v1322
        %vm1342 = vcmask 1043456
        %v1343 = vsel %vm1342, %v1341, %v1325
        %vm1344 = vcmask 1044480
        %v1345 = vsel %vm1344, %v1343, %v1328
        %v1346 = vsel %vm1222, %v1345, %v1291
        %vm1347 = vcmask 1046528
        %v1348 = vsel %vm1347, %v1346, %v1331
        %v1349 = vadd.f32 %v1348, %v1212
        %v1350 = vadd.f32 %v1334, %v1213
        %v1351 = vld [vmem:[%s399] sm:$0x1]
        %v1352 = vperm.slane %v1351, 0
        %v1353 = vsub.f32 %v1349, %v1352
        %v1354 = vsub.f32 %v1350, %v1352
        %v1355 = vsel %vm1336, %v1354, -inf
        %v1356 = vmax.f32 %v1353, %v1355
        %v1357 = vrot.slane %v1356, 4
        %v1358 = vmax.f32 %v1356, %v1357
        %v1359 = vrot.slane %v1358, 2
        %v1360 = vmax.f32 %v1358, %v1359
        %v1361 = vrot.slane %v1360, 1
        %v1362 = vmax.f32 %v1360, %v1361
        %v1363 = vsub.f32 %v1353, %v1362
        %v1364 = vsub.f32 %v1354, %v1362
        %v1365 = vmul.f32 %v1363, 1.442695
        %v1366 = vpow.pop %v1365
        %v1367 = vmul.f32 %v1364, 1.442695
        %v1368 = vpow.pop %v1367
        %v1369 = vsel %vm1336, %v1368, 0.0
        %v1370 = vadd.f32 %v1366, %v1369
        %v1371 = vrot.slane %v1370, 4
        %v1372 = vadd.f32 %v1370, %v1371
        %v1373 = vrot.slane %v1372, 2
        %v1374 = vadd.f32 %v1372, %v1373
        %v1375 = vrot.slane %v1374, 1
        %v1376 = vadd.f32 %v1374, %v1375
        %v1377 = vrcp.pop %v1376
        %v1378 = vmul.f32 %v1376, %v1377
        %v1379 = vsub.f32 1.0, %v1378
        %v1380 = vmul.f32 %v1377, %v1379
        %v1381 = vadd.f32 %v1377, %v1380
        %vm1382 = vweird.f32 %v1376
        %vm1383 = vweird.f32 %v1377
        %vm1384 = vmor %vm1382, %vm1383
        %v1385 = vsel %vm1384, %v1377, %v1381
        %v1386 = vand.u32 2147483647, %v1376
        %vm1387 = vcmp.eq.f32.partialorder %v1386, 8.507059e+37
        %v1388 = vand.u32 %v1376, 2147483648
        %v1389 = vor.u32 1.1754944e-38, %v1388
        %v1390 = vsel %vm1387, %v1389, %v1385
        %v1391 = vmul.f32 %v1366, %v1390
        %v1392 = vmul.f32 %v1368, %v1390
        %v1393 = vperm.slane %v1391, 0
        %v1394 = vmul.f32 %v1219, %v1393
        %v1395 = vperm.slane %v1391, 1
        %v1396 = vmul.f32 %v1219, %v1395
        %v1397 = vperm.slane %v1391, 2
        %v1398 = vmul.f32 %v1219, %v1397
        %v1399 = vperm.slane %v1391, 3
        %v1400 = vmul.f32 %v1219, %v1399
        %v1401 = vperm.slane %v1391, 4
        %v1402 = vmul.f32 %v1219, %v1401
        %v1403 = vperm.slane %v1391, 5
        %v1404 = vmul.f32 %v1219, %v1403
        %v1405 = vperm.slane %v1391, 6
        %v1406 = vmul.f32 %v1219, %v1405
        %v1407 = vperm.slane %v1391, 7
        %v1408 = vmul.f32 %v1219, %v1407
        %v1409 = vperm.slane %v1392, 0
        %v1410 = vmul.f32 %v1219, %v1409
        %v1411 = vmul.f32 %v1211, %v1096
        %v1412 = vsel %vm1222, %v1411, 0.0
        %v1413 = vrot.slane %v1412, 4
        %v1414 = vadd.f32 %v1412, %v1413
        %v1415 = vrot.slane %v1414, 2
        %v1416 = vadd.f32 %v1414, %v1415
        %v1417 = vrot.slane %v1416, 1
        %v1418 = vadd.f32 %v1416, %v1417
        %v1419 = vmul.f32 %v1418, 2.0
        %v1420 = vsub.f32 %v1419, %v1096
        %v1421 = vmul.f32 %v1211, %v1110
        %v1422 = vsel %vm1222, %v1421, 0.0
        %v1423 = vrot.slane %v1422, 4
        %v1424 = vadd.f32 %v1422, %v1423
        %v1425 = vrot.slane %v1424, 2
        %v1426 = vadd.f32 %v1424, %v1425
        %v1427 = vrot.slane %v1426, 1
        %v1428 = vadd.f32 %v1426, %v1427
        %v1429 = vmul.f32 %v1428, 2.0
        %v1430 = vsub.f32 %v1429, %v1110
        %v1431 = vmul.f32 %v1211, %v1124
        %v1432 = vsel %vm1222, %v1431, 0.0
        %v1433 = vrot.slane %v1432, 4
        %v1434 = vadd.f32 %v1432, %v1433
        %v1435 = vrot.slane %v1434, 2
        %v1436 = vadd.f32 %v1434, %v1435
        %v1437 = vrot.slane %v1436, 1
        %v1438 = vadd.f32 %v1436, %v1437
        %v1439 = vmul.f32 %v1438, 2.0
        %v1440 = vsub.f32 %v1439, %v1124
        %v1441 = vmul.f32 %v1211, %v1138
        %v1442 = vsel %vm1222, %v1441, 0.0
        %v1443 = vrot.slane %v1442, 4
        %v1444 = vadd.f32 %v1442, %v1443
        %v1445 = vrot.slane %v1444, 2
        %v1446 = vadd.f32 %v1444, %v1445
        %v1447 = vrot.slane %v1446, 1
        %v1448 = vadd.f32 %v1446, %v1447
        %v1449 = vmul.f32 %v1448, 2.0
        %v1450 = vsub.f32 %v1449, %v1138
        %v1451 = vmul.f32 %v1211, %v1152
        %v1452 = vsel %vm1222, %v1451, 0.0
        %v1453 = vrot.slane %v1452, 4
        %v1454 = vadd.f32 %v1452, %v1453
        %v1455 = vrot.slane %v1454, 2
        %v1456 = vadd.f32 %v1454, %v1455
        %v1457 = vrot.slane %v1456, 1
        %v1458 = vadd.f32 %v1456, %v1457
        %v1459 = vmul.f32 %v1458, 2.0
        %v1460 = vsub.f32 %v1459, %v1152
        %v1461 = vmul.f32 %v1211, %v1166
        %v1462 = vsel %vm1222, %v1461, 0.0
        %v1463 = vrot.slane %v1462, 4
        %v1464 = vadd.f32 %v1462, %v1463
        %v1465 = vrot.slane %v1464, 2
        %v1466 = vadd.f32 %v1464, %v1465
        %v1467 = vrot.slane %v1466, 1
        %v1468 = vadd.f32 %v1466, %v1467
        %v1469 = vmul.f32 %v1468, 2.0
        %v1470 = vsub.f32 %v1469, %v1166
        %v1471 = vmul.f32 %v1211, %v1180
        %v1472 = vsel %vm1222, %v1471, 0.0
        %v1473 = vrot.slane %v1472, 4
        %v1474 = vadd.f32 %v1472, %v1473
        %v1475 = vrot.slane %v1474, 2
        %v1476 = vadd.f32 %v1474, %v1475
        %v1477 = vrot.slane %v1476, 1
        %v1478 = vadd.f32 %v1476, %v1477
        %v1479 = vmul.f32 %v1478, 2.0
        %v1480 = vsub.f32 %v1479, %v1180
        %v1481 = vmul.f32 %v1211, %v1194
        %v1482 = vsel %vm1222, %v1481, 0.0
        %v1483 = vrot.slane %v1482, 4
        %v1484 = vadd.f32 %v1482, %v1483
        %v1485 = vrot.slane %v1484, 2
        %v1486 = vadd.f32 %v1484, %v1485
        %v1487 = vrot.slane %v1486, 1
        %v1488 = vadd.f32 %v1486, %v1487
        %v1489 = vmul.f32 %v1488, 2.0
        %v1490 = vsub.f32 %v1489, %v1194
        %v1491 = vmul.f32 %v1211, %v1208
        %v1492 = vsel %vm1222, %v1491, 0.0
        %v1493 = vrot.slane %v1492, 4
        %v1494 = vadd.f32 %v1492, %v1493
        %v1495 = vrot.slane %v1494, 2
        %v1496 = vadd.f32 %v1494, %v1495
        %v1497 = vrot.slane %v1496, 1
        %v1498 = vadd.f32 %v1496, %v1497
        %v1499 = vmul.f32 %v1498, 2.0
        %v1500 = vsub.f32 %v1499, %v1208
        %v1502 = vrot.slane %v1420, 6
        %v1505 = vrot.slane %v1430, 5
        %v1508 = vrot.slane %v1440, 4
        %v1511 = vrot.slane %v1450, 3
        %v1514 = vrot.slane %v1460, 2
        %v1517 = vrot.slane %v1470, 1
        %v1520 = vrot.slane %v1490, 7
        %v1523 = vrot.slane %v1500, 6
        %v1525 = vsel %vm1336, %v1502, %v1505
        %v1526 = vsel %vm1338, %v1525, %v1508
        %v1527 = vsel %vm1340, %v1526, %v1511
        %v1528 = vsel %vm1342, %v1527, %v1514
        %v1529 = vsel %vm1344, %v1528, %v1517
        %v1530 = vsel %vm1222, %v1529, %v1480
        %v1531 = vsel %vm1347, %v1530, %v1520
        %v1532 = vadd.f32 %v1531, %v1212
        %v1533 = vadd.f32 %v1523, %v1213
        %v1534 = vld [vmem:[%s399 + $0x1] sm:$0x1]
        %v1535 = vperm.slane %v1534, 0
        %v1536 = vsub.f32 %v1532, %v1535
        %v1537 = vsub.f32 %v1533, %v1535
        %v1538 = vsel %vm1336, %v1537, -inf
        %v1539 = vmax.f32 %v1536, %v1538
        %v1540 = vrot.slane %v1539, 4
        %v1541 = vmax.f32 %v1539, %v1540
        %v1542 = vrot.slane %v1541, 2
        %v1543 = vmax.f32 %v1541, %v1542
        %v1544 = vrot.slane %v1543, 1
        %v1545 = vmax.f32 %v1543, %v1544
        %v1546 = vsub.f32 %v1536, %v1545
        %v1547 = vsub.f32 %v1537, %v1545
        %v1548 = vmul.f32 %v1546, 1.442695
        %v1549 = vpow.pop %v1548
        %v1550 = vmul.f32 %v1547, 1.442695
        %v1551 = vpow.pop %v1550
        %v1552 = vsel %vm1336, %v1551, 0.0
        %v1553 = vadd.f32 %v1549, %v1552
        %v1554 = vrot.slane %v1553, 4
        %v1555 = vadd.f32 %v1553, %v1554
        %v1556 = vrot.slane %v1555, 2
        %v1557 = vadd.f32 %v1555, %v1556
        %v1558 = vrot.slane %v1557, 1
        %v1559 = vadd.f32 %v1557, %v1558
        %v1560 = vrcp.pop %v1559
        %v1561 = vmul.f32 %v1559, %v1560
        %v1562 = vsub.f32 1.0, %v1561
        %v1563 = vmul.f32 %v1560, %v1562
        %v1564 = vadd.f32 %v1560, %v1563
        %vm1565 = vweird.f32 %v1559
        %vm1566 = vweird.f32 %v1560
        %vm1567 = vmor %vm1565, %vm1566
        %v1568 = vsel %vm1567, %v1560, %v1564
        %v1569 = vand.u32 2147483647, %v1559
        %vm1570 = vcmp.eq.f32.partialorder %v1569, 8.507059e+37
        %v1571 = vand.u32 %v1559, 2147483648
        %v1572 = vor.u32 1.1754944e-38, %v1571
        %v1573 = vsel %vm1570, %v1572, %v1568
        %v1574 = vmul.f32 %v1549, %v1573
        %v1575 = vmul.f32 %v1551, %v1573
        %v1576 = vperm.slane %v1574, 0
        %v1577 = vmul.f32 %v1220, %v1576
        %v1578 = vperm.slane %v1574, 1
        %v1579 = vmul.f32 %v1220, %v1578
        %v1580 = vperm.slane %v1574, 2
        %v1581 = vmul.f32 %v1220, %v1580
        %v1582 = vperm.slane %v1574, 3
        %v1583 = vmul.f32 %v1220, %v1582
        %v1584 = vperm.slane %v1574, 4
        %v1585 = vmul.f32 %v1220, %v1584
        %v1586 = vperm.slane %v1574, 5
        %v1587 = vmul.f32 %v1220, %v1586
        %v1588 = vperm.slane %v1574, 6
        %v1589 = vmul.f32 %v1220, %v1588
        %v1590 = vperm.slane %v1574, 7
        %v1591 = vmul.f32 %v1220, %v1590
        %v1592 = vperm.slane %v1575, 0
        %v1593 = vmul.f32 %v1220, %v1592
        // Predicated region
        $region77: #{tpu_custom_call.1} parent=43 // pred_check
          %p1594 = pneg %p487
        $region78: #{tpu_custom_call.1} parent=43 // pred_check_branch
          %1596 = sbr.rel (%p1594) target = $region80
        $region79: #{tpu_custom_call.1} parent=43 // pred_region
          %1597 = vst [vmem:[%s482] sm:$0xff] %v1391
          %1598 = vst [vmem:[%s482 + $0x8] sm:$0x1] %v1392
          %s1599 = scalar_lea.vmem %s482, 16 [#allocation16]
          %1600 = vst [vmem:[%s1599] sm:$0xff] %v1574
          %1601 = vst [vmem:[%s1599 + $0x8] sm:$0x1] %v1575
        $region80: #{tpu_custom_call.1} parent=43 // pred_fallthru
          _
        %v1602 = vpack.c.bf16 %v1577, %v1394
        %v1603 = vpack.c.bf16 %v1579, %v1396
        %v1604 = vpack.c.bf16 %v1581, %v1398
        %v1605 = vpack.c.bf16 %v1583, %v1400
        %v1606 = vpack.c.bf16 %v1585, %v1402
        %v1607 = vpack.c.bf16 %v1587, %v1404
        %v1608 = vpack.c.bf16 %v1589, %v1406
        %v1609 = vpack.c.bf16 %v1591, %v1408
        %v1610 = vpack.c.bf16 %v1593, %v1410
        %1611 = vmatpush.bf16.msra.mxu0 %v947
        %1612 = vmatpush.bf16.msra.mxu0 %v946
        %1613 = vmatpush.bf16.msra.mxu0 %v945
        %1614 = vmatpush.bf16.msra.mxu0 %v944
        %1615 = vmatpush.bf16.msra.mxu0 %v943
        %1616 = vmatpush.bf16.msra.mxu0 %v942
        %1617 = vmatpush.bf16.msra.mxu0 %v941
        %1618 = vmatpush.bf16.msra.mxu0 %v940
        %1619 = vmatmul.bf16.gmra.mxu0 %v1602
        %v1620 = vpop.f32.mrf.mxu0
        %v1621 = vadd.f32 0.0, %v1620
        %v1622 = vpop.f32.mrf.mxu0
        %v1623 = vadd.f32 0.0, %v1622
        %1624 = vdwg.mxu0
        %1625 = vmatpush.bf16.msra.mxu0 %v955
        %1626 = vmatpush.bf16.msra.mxu0 %v954
        %1627 = vmatpush.bf16.msra.mxu0 %v953
        %1628 = vmatpush.bf16.msra.mxu0 %v952
        %1629 = vmatpush.bf16.msra.mxu0 %v951
        %1630 = vmatpush.bf16.msra.mxu0 %v950
        %1631 = vmatpush.bf16.msra.mxu0 %v949
        %1632 = vmatpush.bf16.msra.mxu0 %v948
        %1633 = vmatmul.bf16.gmra.mxu0 %v1603
        %v1634 = vpop.f32.mrf.mxu0
        %v1635 = vadd.f32 %v1621, %v1634
        %v1636 = vpop.f32.mrf.mxu0
        %v1637 = vadd.f32 %v1623, %v1636
        %1638 = vdwg.mxu0
        %1639 = vmatpush.bf16.msra.mxu0 %v963
        %1640 = vmatpush.bf16.msra.mxu0 %v962
        %1641 = vmatpush.bf16.msra.mxu0 %v961
        %1642 = vmatpush.bf16.msra.mxu0 %v960
        %1643 = vmatpush.bf16.msra.mxu0 %v959
        %1644 = vmatpush.bf16.msra.mxu0 %v958
        %1645 = vmatpush.bf16.msra.mxu0 %v957
        %1646 = vmatpush.bf16.msra.mxu0 %v956
        %1647 = vmatmul.bf16.gmra.mxu0 %v1604
        %v1648 = vpop.f32.mrf.mxu0
        %v1649 = vadd.f32 %v1635, %v1648
        %v1650 = vpop.f32.mrf.mxu0
        %v1651 = vadd.f32 %v1637, %v1650
        %1652 = vdwg.mxu0
        %1653 = vmatpush.bf16.msra.mxu0 %v971
        %1654 = vmatpush.bf16.msra.mxu0 %v970
        %1655 = vmatpush.bf16.msra.mxu0 %v969
        %1656 = vmatpush.bf16.msra.mxu0 %v968
        %1657 = vmatpush.bf16.msra.mxu0 %v967
        %1658 = vmatpush.bf16.msra.mxu0 %v966
        %1659 = vmatpush.bf16.msra.mxu0 %v965
        %1660 = vmatpush.bf16.msra.mxu0 %v964
        %1661 = vmatmul.bf16.gmra.mxu0 %v1605
        %v1662 = vpop.f32.mrf.mxu0
        %v1663 = vadd.f32 %v1649, %v1662
        %v1664 = vpop.f32.mrf.mxu0
        %v1665 = vadd.f32 %v1651, %v1664
        %1666 = vdwg.mxu0
        %1667 = vmatpush.bf16.msra.mxu0 %v979
        %1668 = vmatpush.bf16.msra.mxu0 %v978
        %1669 = vmatpush.bf16.msra.mxu0 %v977
        %1670 = vmatpush.bf16.msra.mxu0 %v976
        %1671 = vmatpush.bf16.msra.mxu0 %v975
        %1672 = vmatpush.bf16.msra.mxu0 %v974
        %1673 = vmatpush.bf16.msra.mxu0 %v973
        %1674 = vmatpush.bf16.msra.mxu0 %v972
        %1675 = vmatmul.bf16.gmra.mxu0 %v1606
        %v1676 = vpop.f32.mrf.mxu0
        %v1677 = vadd.f32 %v1663, %v1676
        %v1678 = vpop.f32.mrf.mxu0
        %v1679 = vadd.f32 %v1665, %v1678
        %1680 = vdwg.mxu0
        %1681 = vmatpush.bf16.msra.mxu0 %v987
        %1682 = vmatpush.bf16.msra.mxu0 %v986
        %1683 = vmatpush.bf16.msra.mxu0 %v985
        %1684 = vmatpush.bf16.msra.mxu0 %v984
        %1685 = vmatpush.bf16.msra.mxu0 %v983
        %1686 = vmatpush.bf16.msra.mxu0 %v982
        %1687 = vmatpush.bf16.msra.mxu0 %v981
        %1688 = vmatpush.bf16.msra.mxu0 %v980
        %1689 = vmatmul.bf16.gmra.mxu0 %v1607
        %v1690 = vpop.f32.mrf.mxu0
        %v1691 = vadd.f32 %v1677, %v1690
        %v1692 = vpop.f32.mrf.mxu0
        %v1693 = vadd.f32 %v1679, %v1692
        %1694 = vdwg.mxu0
        %1695 = vmatpush.bf16.msra.mxu0 %v995
        %1696 = vmatpush.bf16.msra.mxu0 %v994
        %1697 = vmatpush.bf16.msra.mxu0 %v993
        %1698 = vmatpush.bf16.msra.mxu0 %v992
        %1699 = vmatpush.bf16.msra.mxu0 %v991
        %1700 = vmatpush.bf16.msra.mxu0 %v990
        %1701 = vmatpush.bf16.msra.mxu0 %v989
        %1702 = vmatpush.bf16.msra.mxu0 %v988
        %1703 = vmatmul.bf16.gmra.mxu0 %v1608
        %v1704 = vpop.f32.mrf.mxu0
        %v1705 = vadd.f32 %v1691, %v1704
        %v1706 = vpop.f32.mrf.mxu0
        %v1707 = vadd.f32 %v1693, %v1706
        %1708 = vdwg.mxu0
        %1709 = vmatpush.bf16.msra.mxu0 %v1003
        %1710 = vmatpush.bf16.msra.mxu0 %v1002
        %1711 = vmatpush.bf16.msra.mxu0 %v1001
        %1712 = vmatpush.bf16.msra.mxu0 %v1000
        %1713 = vmatpush.bf16.msra.mxu0 %v999
        %1714 = vmatpush.bf16.msra.mxu0 %v998
        %1715 = vmatpush.bf16.msra.mxu0 %v997
        %1716 = vmatpush.bf16.msra.mxu0 %v996
        %1717 = vmatmul.bf16.gmra.mxu0 %v1609
        %v1718 = vpop.f32.mrf.mxu0
        %v1719 = vadd.f32 %v1705, %v1718
        %v1720 = vpop.f32.mrf.mxu0
        %v1721 = vadd.f32 %v1707, %v1720
        %1722 = vdwg.mxu0
        %1723 = vmatpush.bf16.msra.mxu0 %v1011
        %1724 = vmatpush.bf16.msra.mxu0 %v1010
        %1725 = vmatpush.bf16.msra.mxu0 %v1009
        %1726 = vmatpush.bf16.msra.mxu0 %v1008
        %1727 = vmatpush.bf16.msra.mxu0 %v1007
        %1728 = vmatpush.bf16.msra.mxu0 %v1006
        %1729 = vmatpush.bf16.msra.mxu0 %v1005
        %1730 = vmatpush.bf16.msra.mxu0 %v1004
        %1731 = vmatmul.bf16.gmra.mxu0 %v1610
        %v1732 = vpop.f32.mrf.mxu0
        %v1733 = vadd.f32 %v1719, %v1732
        %v1734 = vpop.f32.mrf.mxu0
        %v1735 = vadd.f32 %v1721, %v1734
        %1736 = vdwg.mxu0
        %s1737 = scalar_lea.vmem [#allocation2], %s647
        %v1738 = vld [vmem:[%s1737] sm:$0xff]
        %v1739 = vld [vmem:[%s1737 + $0x8] sm:$0xff]
        %v1740 = vadd.f32 %v1738, %v1733
        %v1741 = vadd.f32 %v1739, %v1735
        %1742 = vst [vmem:[%s1737] sm:$0xff] %v1740
        %1743 = vst [vmem:[%s1737 + $0x8] sm:$0xff] %v1741
        %p1744 = scmp.eq.s32.totalorder %s41, 1
        %p1745 = scmp.ne.s32.totalorder %s40, 9
        %p1746 = pnand %p1744, %p1745
        %p1747 = pneg %p1746
        // Predicated region
        $region81: #{tpu_custom_call.1} parent=43 // pred_check
          _
        $region82: #{tpu_custom_call.1} parent=43 // pred_check_branch
          %1749 = sbr.rel (%p1746) target = $region84
        $region83: #{tpu_custom_call.1} parent=43 // pred_region
          %v1750 = vld [vmem:[#allocation2 + $0x6] sm:$0x1]
          %v1751 = vmax.f32 %v1750, 1e-16
          %v1752 = vld [vmem:[#allocation2] sm:$0x3f]
          %v1753 = vperm.slane %v1751, 0
          %v1754 = vrcp.pop %v1753
          %v1755 = vmul.f32 %v1753, %v1754
          %v1756 = vsub.f32 1.0, %v1755
          %v1757 = vmul.f32 %v1754, %v1756
          %v1758 = vadd.f32 %v1754, %v1757
          %vm1759 = vweird.f32 %v1753
          %vm1760 = vweird.f32 %v1754
          %vm1761 = vmor %vm1759, %vm1760
          %v1762 = vsel %vm1761, %v1754, %v1758
          %v1763 = vand.u32 2147483647, %v1753
          %vm1764 = vcmp.eq.f32.partialorder %v1763, 8.507059e+37
          %v1765 = vand.u32 %v1753, 2147483648
          %v1766 = vor.u32 1.1754944e-38, %v1765
          %v1767 = vsel %vm1764, %v1766, %v1762
          %v1768 = vmul.f32 %v1752, %v1767
          %1769 = vst [vmem:[#allocation3] sm:$0x3f] %v1768
          %v1770 = vmul.f32 %v1768, %v1768
          %v1771 = vsel %vm1222, %v1770, 0.0
          %v1772 = vrot.slane %v1771, 4
          %v1773 = vadd.f32 %v1771, %v1772
          %v1774 = vrot.slane %v1773, 2
          %v1775 = vadd.f32 %v1773, %v1774
          %v1776 = vrot.slane %v1775, 1
          %v1777 = vadd.f32 %v1775, %v1776
          %1778 = vst [vmem:[#allocation3 + $0x6] sm:$0x1] %v1777
          %v1779 = vld [vmem:[#allocation2 + $0xe] sm:$0x1]
          %v1780 = vmax.f32 %v1779, 1e-16
          %v1781 = vld [vmem:[#allocation2 + $0x8] sm:$0x3f]
          %v1782 = vperm.slane %v1780, 0
          %v1783 = vrcp.pop %v1782
          %v1784 = vmul.f32 %v1782, %v1783
          %v1785 = vsub.f32 1.0, %v1784
          %v1786 = vmul.f32 %v1783, %v1785
          %v1787 = vadd.f32 %v1783, %v1786
          %vm1788 = vweird.f32 %v1782
          %vm1789 = vweird.f32 %v1783
          %vm1790 = vmor %vm1788, %vm1789
          %v1791 = vsel %vm1790, %v1783, %v1787
          %v1792 = vand.u32 2147483647, %v1782
          %vm1793 = vcmp.eq.f32.partialorder %v1792, 8.507059e+37
          %v1794 = vand.u32 %v1782, 2147483648
          %v1795 = vor.u32 1.1754944e-38, %v1794
          %v1796 = vsel %vm1793, %v1795, %v1791
          %v1797 = vmul.f32 %v1781, %v1796
          %1798 = vst [vmem:[#allocation3 + $0x8] sm:$0x3f] %v1797
          %v1799 = vmul.f32 %v1797, %v1797
          %v1800 = vsel %vm1222, %v1799, 0.0
          %v1801 = vrot.slane %v1800, 4
          %v1802 = vadd.f32 %v1800, %v1801
          %v1803 = vrot.slane %v1802, 2
          %v1804 = vadd.f32 %v1802, %v1803
          %v1805 = vrot.slane %v1804, 1
          %v1806 = vadd.f32 %v1804, %v1805
          %1807 = vst [vmem:[#allocation3 + $0xe] sm:$0x1] %v1806
        $region84: #{tpu_custom_call.1} parent=43 // pred_fallthru
          _
        %p1808 = pnand %p1744, %p487
        %p1809 = pneg %p1808
        // Predicated region
        $region85: #{tpu_custom_call.1} parent=43 // pred_check
          _
        $region86: #{tpu_custom_call.1} parent=43 // pred_check_branch
          %1811 = sbr.rel (%p1808) target = $region88
        $region87: #{tpu_custom_call.1} parent=43 // pred_region
          %v1812 = vld [vmem:[#allocation2 + $0x6] sm:$0x1]
          %v1813 = vmax.f32 %v1812, 1e-16
          %v1814 = vld [vmem:[#allocation2] sm:$0xf]
          %v1815 = vperm.slane %v1813, 0
          %v1816 = vrcp.pop %v1815
          %v1817 = vmul.f32 %v1815, %v1816
          %v1818 = vsub.f32 1.0, %v1817
          %v1819 = vmul.f32 %v1816, %v1818
          %v1820 = vadd.f32 %v1816, %v1819
          %vm1821 = vweird.f32 %v1815
          %vm1822 = vweird.f32 %v1816
          %vm1823 = vmor %vm1821, %vm1822
          %v1824 = vsel %vm1823, %v1816, %v1820
          %v1825 = vand.u32 2147483647, %v1815
          %vm1826 = vcmp.eq.f32.partialorder %v1825, 8.507059e+37
          %v1827 = vand.u32 %v1815, 2147483648
          %v1828 = vor.u32 1.1754944e-38, %v1827
          %v1829 = vsel %vm1826, %v1828, %v1824
          %v1830 = vmul.f32 %v1814, %v1829
          %1831 = vst [vmem:[#allocation17] sm:$0xf] %v1830
          %v1832 = vld [vmem:[#allocation2 + $0xe] sm:$0x1]
          %v1833 = vmax.f32 %v1832, 1e-16
          %v1834 = vld [vmem:[#allocation2 + $0x8] sm:$0xf]
          %v1835 = vperm.slane %v1833, 0
          %v1836 = vrcp.pop %v1835
          %v1837 = vmul.f32 %v1835, %v1836
          %v1838 = vsub.f32 1.0, %v1837
          %v1839 = vmul.f32 %v1836, %v1838
          %v1840 = vadd.f32 %v1836, %v1839
          %vm1841 = vweird.f32 %v1835
          %vm1842 = vweird.f32 %v1836
          %vm1843 = vmor %vm1841, %vm1842
          %v1844 = vsel %vm1843, %v1836, %v1840
          %v1845 = vand.u32 2147483647, %v1835
          %vm1846 = vcmp.eq.f32.partialorder %v1845, 8.507059e+37
          %v1847 = vand.u32 %v1835, 2147483648
          %v1848 = vor.u32 1.1754944e-38, %v1847
          %v1849 = vsel %vm1846, %v1848, %v1844
          %v1850 = vmul.f32 %v1834, %v1849
          %s1851 = scalar_lea.vmem [#allocation17], 4
          %1852 = vst [vmem:[%s1851] sm:$0xf] %v1850
        $region88: #{tpu_custom_call.1} parent=43 // pred_fallthru
          _
        %s1853 = sand.u32 %s207, 1
        %s1854 = sand.u32 %s207, 1
        %s1855 = smul.addr %s1854, 32
        %s1856 = scalar_lea.vmem [#allocation16], %s1855
        // Predicated region
        $region89: #{tpu_custom_call.1} parent=43 // pred_check
          %p1857 = pneg %p217
        $region90: #{tpu_custom_call.1} parent=43 // pred_check_branch
          %1859 = sbr.rel (%p1857) target = $region92
        $region91: #{tpu_custom_call.1} parent=43 // pred_region
          %s1860 = smul.addr %s41, 8
          %s1861 = scalar_lea.vmem %s7, %s1860
          // Predicated region
          $region93: #{tpu_custom_call.1} parent=91 // pred_check
            _
          $region94: #{tpu_custom_call.1} parent=91 // pred_check_branch
            %1863 = sbr.rel (0) target = $region96
          $region95: #{tpu_custom_call.1} parent=91 // pred_region
            // Predicated region
            $region97: #{tpu_custom_call.1} parent=95 // pred_check
              _
            $region98: #{tpu_custom_call.1} parent=95 // pred_check_branch
              %1865 = sbr.rel (0) target = $region100
            $region99: #{tpu_custom_call.1} parent=95 // pred_region
              // Predicated region
              $region112: #{tpu_custom_call.1} parent=99 // pred_check
                _
              $region113: #{tpu_custom_call.1} parent=99 // pred_check_branch
                %1887 = sbr.rel (0) target = $region115
              $region114: #{tpu_custom_call.1} parent=99 // pred_region
                loop: start=0, step=1, limit=1
                $region116: #{tpu_custom_call.1} parent=114 // loop_pre_header
                  _
                $region117: #{tpu_custom_call.1} parent=114 // loop_header
                  %s1889 = sphi 0, %s1893
                  %p1890 = scmp.ge.s32.totalorder %s1889, 1
                  %s1894 = sphi %s1856, %s1856
                  %s1895 = sphi %s1861, %s1861
                $region118: #{tpu_custom_call.1} parent=114 // loop_header_branch
                  %1892 = sbr.rel (%p1890) target = $region122
                $region119: #{tpu_custom_call.1} parent=114 // loop_body
                  %v1896 = vld [vmem:[%s1894] sm:$0xff]
                  %1897 = vst [vmem:[%s1895] sm:$0xff] %v1896
                  %v1898 = vld [vmem:[%s1894 + $0x8] sm:$0xff]
                  %1899 = vst [vmem:[%s1895 + $0x10] sm:$0xff] %v1898
                  %v1900 = vld [vmem:[%s1894 + $0x10] sm:$0xff]
                  %1901 = vst [vmem:[%s1895 + $0x20] sm:$0xff] %v1900
                  %v1902 = vld [vmem:[%s1894 + $0x18] sm:$0xff]
                  %1903 = vst [vmem:[%s1895 + $0x30] sm:$0xff] %v1902
                $region120: #{tpu_custom_call.1} parent=114 // loop_footer
                  %s1893 = sadd.s32 1, %s1889
                $region121: #{tpu_custom_call.1} parent=114 // loop_footer_branch
                  %1888 = sbr.rel target = $region117
                $region122: #{tpu_custom_call.1} parent=114 // loop_exit
                  _
              $region115: #{tpu_custom_call.1} parent=99 // pred_fallthru
                _
              // Predicated region
              $region123: #{tpu_custom_call.1} parent=99 // pred_check
                _
              $region124: #{tpu_custom_call.1} parent=99 // pred_check_branch
                %1905 = sbr.rel target = $region126
              $region125: #{tpu_custom_call.1} parent=99 // pred_region
                _
              $region126: #{tpu_custom_call.1} parent=99 // pred_fallthru
                _
            $region100: #{tpu_custom_call.1} parent=95 // pred_fallthru
              _
            // Predicated region
            $region101: #{tpu_custom_call.1} parent=95 // pred_check
              _
            $region102: #{tpu_custom_call.1} parent=95 // pred_check_branch
              %1867 = sbr.rel target = $region104
            $region103: #{tpu_custom_call.1} parent=95 // pred_region
              %s1869 = ssub.s32 256, 1
              loop: start=0, step=1, limit=1
              $region105: #{tpu_custom_call.1} parent=103 // loop_pre_header
                _
              $region106: #{tpu_custom_call.1} parent=103 // loop_header
                %s1871 = sphi 0, %s1875
                %p1872 = scmp.ge.s32.totalorder %s1871, 1
                %s1876 = sphi %s1856, %s1856
                %s1877 = sphi %s1861, %s1861
              $region107: #{tpu_custom_call.1} parent=103 // loop_header_branch
                %1874 = sbr.rel (%p1872) target = $region111
              $region108: #{tpu_custom_call.1} parent=103 // loop_body
                %v1878 = vld [vmem:[%s1876] sm:%s1869]
                %1879 = vst [vmem:[%s1877] sm:%s1869] %v1878
                %v1880 = vld [vmem:[%s1876 + $0x8] sm:%s1869]
                %1881 = vst [vmem:[%s1877 + $0x10] sm:%s1869] %v1880
                %v1882 = vld [vmem:[%s1876 + $0x10] sm:%s1869]
                %1883 = vst [vmem:[%s1877 + $0x20] sm:%s1869] %v1882
                %v1884 = vld [vmem:[%s1876 + $0x18] sm:%s1869]
                %1885 = vst [vmem:[%s1877 + $0x30] sm:%s1869] %v1884
              $region109: #{tpu_custom_call.1} parent=103 // loop_footer
                %s1875 = sadd.s32 1, %s1871
              $region110: #{tpu_custom_call.1} parent=103 // loop_footer_branch
                %1870 = sbr.rel target = $region106
              $region111: #{tpu_custom_call.1} parent=103 // loop_exit
                _
            $region104: #{tpu_custom_call.1} parent=95 // pred_fallthru
              _
          $region96: #{tpu_custom_call.1} parent=91 // pred_fallthru
            _
          %1906 = vnop
        $region92: #{tpu_custom_call.1} parent=43 // pred_fallthru
          _
        // Predicated region
        $region127: #{tpu_custom_call.1} parent=43 // pred_check
          %p1907 = pneg %p238
        $region128: #{tpu_custom_call.1} parent=43 // pred_check_branch
          %1909 = sbr.rel (%p1907) target = $region130
        $region129: #{tpu_custom_call.1} parent=43 // pred_region
          %1911 = vsyncadd [#allocation8], 0
          %s1912 = sshll.u32 [#allocation17], 4
          %s1913 = int_to_ptr.vmem [resolvable:$true] %s1912
          %s1914 = sshll.u32 %s8, 4
          %s1915 = int_to_ptr.hbm [resolvable:$true] %s1914
          %1920 = dma.vmem_to_hbm [thread:$0]  %s1913, 128, %s1915, [#allocation8], 64, 64, 4
        $region130: #{tpu_custom_call.1} parent=43 // pred_fallthru
          _
        // Predicated region
        $region131: #{tpu_custom_call.1} parent=43 // pred_check
          %p1921 = pneg %p238
        $region132: #{tpu_custom_call.1} parent=43 // pred_check_branch
          %1923 = sbr.rel (%p1921) target = $region134
        $region133: #{tpu_custom_call.1} parent=43 // pred_region
          %1925 = dma.done [#allocation8], 128
        $region134: #{tpu_custom_call.1} parent=43 // pred_fallthru
          _
      $region44: #{tpu_custom_call.1} parent=5 // pred_fallthru
        _
      %p1926 = scmp.le.s32.totalorder 2, %s31
      // Predicated region
      $region135: #{tpu_custom_call.1} parent=5 // pred_check
        %p1927 = pneg %p1926
      $region136: #{tpu_custom_call.1} parent=5 // pred_check_branch
        %1929 = sbr.rel (%p1927) target = $region138
      $region137: #{tpu_custom_call.1} parent=5 // pred_region
        %s1930 = ssub.s32 %s31, 2
        // Predicated region
        $region139: #{tpu_custom_call.1} parent=137 // pred_check
          %p1931 = pneg %p223
        $region140: #{tpu_custom_call.1} parent=137 // pred_check_branch
          %1933 = sbr.rel (%p1931) target = $region142
        $region141: #{tpu_custom_call.1} parent=137 // pred_region
          %s1934 = sand.u32 %s208, 1
          %s1935 = sand.u32 %s208, 1
          %s1936 = smul.addr %s1935, 32
          %s1937 = scalar_lea.vmem [#allocation16], %s1936
        $region142: #{tpu_custom_call.1} parent=137 // pred_fallthru
          _
      $region138: #{tpu_custom_call.1} parent=5 // pred_fallthru
        _
    $region6: #{tpu_custom_call.1} parent=1 // loop_footer
      %s35 = sadd.s32 1, %s31
    $region7: #{tpu_custom_call.1} parent=1 // loop_footer_branch
      %30 = sbr.rel target = $region3
    $region8: #{tpu_custom_call.1} parent=1 // loop_exit
      _
    %1938 = vsyncpa [#allocation7], 1
    %s1939 = scalar_lea.sflag [#allocation7], 1
    %1940 = vsyncpa %s1939, 1
    %1941 = vsyncpa [#allocation10], 1
    %s1942 = scalar_lea.sflag [#allocation10], 1
    %1943 = vsyncpa %s1942, 1
    %1944 = vsyncpa [#allocation13], 1
    %1945 = vsyncpa [#allocation8], 1
    %s1946 = scalar_lea.sflag [#allocation8], 1
    %1947 = vsyncpa %s1946, 1

</llo_original>
